<compile_context>
chip_gen: v6e
topology: v6e:2x2x1
jax: 0.10.0
libtpu: 0.0.40
codegen_flags: <defaults>
</compile_context>

<pallas_src>
import functools

import jax
import jax.numpy as jnp
from jax.experimental import pallas as pl
from jax.experimental.pallas import tpu as pltpu


def _round_up(x, m):
    return ((x + m - 1) // m) * m


def _last_octave_kernel(xh_ref, xl_ref, wh_ref, wl_ref, mh_ref, ml_ref,
                        up_ref, o_ref,
                        padh_ref, padl_ref, ph_ref, plo_ref,
                        *, H, W, Hl, Wl, Nb, K, lp_h, lp_l):
    """One block of Nb images per grid step.

    xh_ref : (Nb, Chp, H*W)     high-freq input (channels zero-padded to Chp)
    xl_ref : (Nb, Clp, Hl*Wl)   low-freq input  (channels zero-padded to Clp)
    wh_ref : (Cout, K*K*Chp)    h2h weights, rows ordered (dy, dx, ci)
    wl_ref : (Cout, K*K*Clp)    l2h weights
    mh_ref : (2, H*W)           {0,1} x-boundary masks (row 0: dx=-1, row 1: dx=+1)
    ml_ref : (2, Hl*Wl)
    up_ref : (Hl*Wl, H*W)       constant one-hot nearest-2x upsample matrix (f32)
    o_ref  : (Nb, Cout, H*W)    lane-dense output
    pad*_ref / p*_ref           VMEM scratch (flat padded images / im2col)
    """
    HW, HlWl = H * W, Hl * Wl

    def build_patches(x_ref, pad_ref, p_ref, m_ref, lp, w, hw):
        nb_, cpad, pw = pad_ref.shape
        # Zero only the halo columns; the interior is fully overwritten below.
        pad_ref[:, :, 0:lp] = jnp.zeros((nb_, cpad, lp), pad_ref.dtype)
        pad_ref[:, :, lp + hw:pw] = jnp.zeros((nb_, cpad, pw - lp - hw),
                                              pad_ref.dtype)

        # Wrapper-precomputed x-boundary masks, broadcast over channels.
        mask_l = m_ref[0:1, :]
        mask_r = m_ref[1:2, :]

        for nb in range(Nb):
            # Flat image at lane offset lp; the conv's y-boundary zero padding
            # comes for free from the zero halo.
            pad_ref[nb, :, lp:lp + hw] = x_ref[nb]
            for dy in range(K):
                for dx in range(K):
                    start = lp + (dy - 1) * w + (dx - 1)
                    t = pad_ref[nb, :, start:start + hw]
                    if dx == 0:
                        t = t * mask_l          # dx = -1: kill x == 0 lanes
                    elif dx == 2:
                        t = t * mask_r          # dx = +1: kill x == w-1 lanes
                    row = (dy * K + dx) * cpad
                    p_ref[row:row + cpad, nb * hw:(nb + 1) * hw] = t

    build_patches(xh_ref, padh_ref, ph_ref, mh_ref, lp_h, W, HW)
    build_patches(xl_ref, padl_ref, plo_ref, ml_ref, lp_l, Wl, HlWl)

    # One MXU matmul per conv branch over the whole image block:
    #   (Cout, K*K*Cpad) @ (K*K*Cpad, Nb*pixels), bf16 operands, f32 accum.
    y_h = jnp.dot(wh_ref[...], ph_ref[...], preferred_element_type=jnp.float32)
    y_l = jnp.dot(wl_ref[...], plo_ref[...], preferred_element_type=jnp.float32)

    up = up_ref[...]                             # (HlWl, HW) f32, resident
    for nb in range(Nb):
        # Nearest 2x upsample as an exact one-hot matmul (f32 -> the combine
        # stays bit-close to the reference); the combine is a lane-dense add.
        y_l_up = jnp.dot(y_l[:, nb * HlWl:(nb + 1) * HlWl], up,
                         preferred_element_type=jnp.float32)
        o_ref[nb] = (y_h[:, nb * HW:(nb + 1) * HW] + y_l_up).astype(o_ref.dtype)


def last_octave_conv_pallas(x_h_nchw, x_l_nchw, w_h_oihw, w_l_oihw,
                            padding=1, block_n=None,
                            compute_dtype=jnp.bfloat16):
    """Inputs/outputs follow the PyTorch module layouts (NCHW / OIHW)."""
    N, Ch, H, W = x_h_nchw.shape
    Nl, Cl, Hl, Wl = x_l_nchw.shape
    Cout, _, K, K2 = w_h_oihw.shape
    assert N == Nl and K == 3 and K2 == 3 and padding == 1
    assert (H, W) == (2 * Hl, 2 * Wl)
    HW, HlWl = H * W, Hl * Wl

    # Images per grid step: amortize per-step overhead / tiny DMAs, but keep
    # >= 2 grid steps so the "parallel" axis still shards across v7x's 2 TCs.
    if block_n is None:
        block_n = max(1, min(8, N // 2))
    while N % block_n:
        block_n -= 1
    steps = N // block_n

    # Pad Cin up to a full sublane tile of the compute dtype (f32: 8, bf16: 16)
    # so every im2col tap store is an unmasked full-tile store.
    pack = 8 * 4 // jnp.dtype(compute_dtype).itemsize
    Chp, Clp = _round_up(Ch, pack), _round_up(Cl, pack)

    def prep_x(x, cp, c, hw):
        if cp > c:
            x = jnp.pad(x, ((0, 0), (0, cp - c), (0, 0), (0, 0)))
        return x.astype(compute_dtype).reshape(N, cp, hw)    # free view reshape

    xh = prep_x(x_h_nchw, Chp, Ch, HW)
    xl = prep_x(x_l_nchw, Clp, Cl, HlWl)

    # Weights as (Cout, K*K*Cpad), rows ordered (dy, dx, ci); zero columns for
    # the padded channels keep the contraction exact.
    def prep_w(w, cp, c):
        if cp > c:
            w = jnp.pad(w, ((0, 0), (0, cp - c), (0, 0), (0, 0)))
        return jnp.transpose(w, (0, 2, 3, 1)).reshape(
            Cout, K * K * cp).astype(compute_dtype)

    wh_mat = prep_w(w_h_oihw, Chp, Ch)
    wl_mat = prep_w(w_l_oihw, Clp, Cl)

    # x-boundary masks hoisted out of the per-step path: computed once here,
    # DMA'd once (fixed block index -> VMEM resident across all steps).
    def edge_masks(w, hw):
        xx = jnp.arange(hw, dtype=jnp.int32) % w
        return jnp.stack([xx >= 1, xx <= w - 2]).astype(compute_dtype)

    mh = edge_masks(W, HW)
    ml = edge_masks(Wl, HlWl)

    # One-hot nearest-2x upsample matrix (exact selection; kept f32 so the low
    # branch stays f32 through the combine).  See O(HW^2) TODO in the header.
    p = jnp.arange(HW, dtype=jnp.int32)
    q_of_p = (p // W // 2) * Wl + (p % W) // 2
    up_mat = (jnp.arange(HlWl, dtype=jnp.int32)[:, None]
              == q_of_p[None, :]).astype(jnp.float32)

    # Padded flat-image geometry: left halo >= W+1 and lane-tile aligned
    # (fixes the latent hard-coded-128 bug for W >= 128).
    lp_h = _round_up(W + 1, 128)
    pw_h = lp_h + _round_up(HW + W + 1, 128)
    lp_l = _round_up(Wl + 1, 128)
    pw_l = lp_l + _round_up(HlWl + Wl + 1, 128)

    # Explicit VMEM budget, sized for v7x's 32 MiB default scoped limit.
    cd = jnp.dtype(compute_dtype).itemsize
    od = jnp.dtype(x_h_nchw.dtype).itemsize
    vmem_bytes = (
        2 * block_n * (Chp * HW + Clp * HlWl) * cd          # inputs (x2 buf)
        + 2 * block_n * Cout * HW * od                      # output (x2 buf)
        + Cout * K * K * (Chp + Clp) * cd                   # weights
        + (2 * HW + 2 * HlWl) * cd + HlWl * HW * 4          # masks + upsample
        + block_n * (Chp * pw_h + Clp * pw_l) * cd          # pad scratch
        + K * K * block_n * (Chp * HW + Clp * HlWl) * cd)   # im2col scratch
    assert vmem_bytes < 32 * 2 ** 20, vmem_bytes

    kernel = functools.partial(_last_octave_kernel, H=H, W=W, Hl=Hl, Wl=Wl,
                               Nb=block_n, K=K, lp_h=lp_h, lp_l=lp_l)

    out_flat = pl.pallas_call(
        kernel,
        out_shape=jax.ShapeDtypeStruct((N, Cout, HW), x_h_nchw.dtype),
        grid_spec=pltpu.PrefetchScalarGridSpec(
            num_scalar_prefetch=0,
            grid=(steps,),
            in_specs=[
                pl.BlockSpec((block_n, Chp, HW), lambda n: (n, 0, 0)),
                pl.BlockSpec((block_n, Clp, HlWl), lambda n: (n, 0, 0)),
                pl.BlockSpec((Cout, K * K * Chp), lambda n: (0, 0)),
                pl.BlockSpec((Cout, K * K * Clp), lambda n: (0, 0)),
                pl.BlockSpec((2, HW), lambda n: (0, 0)),
                pl.BlockSpec((2, HlWl), lambda n: (0, 0)),
                pl.BlockSpec((HlWl, HW), lambda n: (0, 0)),
            ],
            out_specs=pl.BlockSpec((block_n, Cout, HW), lambda n: (n, 0, 0)),
            scratch_shapes=[
                # flat zero-haloed images
                pltpu.VMEM((block_n, Chp, pw_h), compute_dtype),
                pltpu.VMEM((block_n, Clp, pw_l), compute_dtype),
                # im2col operands for the whole image block
                pltpu.VMEM((K * K * Chp, block_n * HW), compute_dtype),
                pltpu.VMEM((K * K * Clp, block_n * HlWl), compute_dtype),
            ],
        ),
        compiler_params=pltpu.CompilerParams(
            dimension_semantics=("parallel",)),
    )(xh, xl, wh_mat, wl_mat, mh, ml, up_mat)

    # Free view back to NCHW.
    return out_flat.reshape(N, Cout, H, W)


def _reference_forward(x_h_nchw, x_l_nchw, w_h_oihw, w_l_oihw):
    """Pure-JAX reference mirroring the PyTorch module (NCHW / OIHW)."""
    def conv(x, w):
        return jax.lax.conv_general_dilated(
            x, w, window_strides=(1, 1), padding=[(1, 1), (1, 1)],
            dimension_numbers=('NCHW', 'OIHW', 'NCHW'))
    y_l = conv(x_l_nchw, w_l_oihw)
    y_h = conv(x_h_nchw, w_h_oihw)
    y_l_up = jnp.repeat(jnp.repeat(y_l, 2, axis=2), 2, axis=3)
    return y_h + y_l_up


if __name__ == "__main__":
    # Module config: in_channels=8, out_channels=8, kernel_size=(3,3),
    # alpha=0.5, stride=1, padding=1  ->  C_l = 4, C_h = 4.
    # N=4 exercises the image-blocking path (block_n=2) with 2 grid steps.
    N, in_channels, out_channels, H, W = 4, 8, 8, 16, 16
    alpha, K = 0.5, 3
    C_l = int(alpha * in_channels)          # 4
    C_h = in_channels - C_l                 # 4

    key = jax.random.PRNGKey(0)
    k_xh, k_xl, k_wh, k_wl = jax.random.split(key, 4)

    x_h_nchw = jax.random.normal(k_xh, (N, C_h, H, W), dtype=jnp.float32)
    x_l_nchw = jax.random.normal(k_xl, (N, C_l, H // 2, W // 2), dtype=jnp.float32)
    w_h_oihw = jax.random.normal(k_wh, (out_channels, C_h, K, K), dtype=jnp.float32) * 0.1
    w_l_oihw = jax.random.normal(k_wl, (out_channels, C_l, K, K), dtype=jnp.float32) * 0.1

    fwd = jax.jit(last_octave_conv_pallas)
    out = jax.block_until_ready(fwd(x_h_nchw, x_l_nchw, w_h_oihw, w_l_oihw))
    assert out.shape == (N, out_channels, H, W)

    # Strict check against a reference using identical bf16-rounded operands
    # (both sides compute exact products with f32 accumulation; only the
    # summation order differs).
    rq = lambda a: a.astype(jnp.bfloat16).astype(jnp.float32)
    ref_bf16 = _reference_forward(rq(x_h_nchw), rq(x_l_nchw),
                                  rq(w_h_oihw), rq(w_l_oihw))
    err = float(jnp.max(jnp.abs(out - ref_bf16)))
    assert err < 1e-3, err

    # Sanity check against the pure-f32 module reference (bounded by the bf16
    # rounding of activations/weights).
    ref_f32 = _reference_forward(x_h_nchw, x_l_nchw, w_h_oihw, w_l_oihw)
    err32 = float(jnp.max(jnp.abs(out - ref_f32)))
    assert err32 < 5e-2, err32

    print("KERNEL_OK")
</pallas_src>

<mosaic_0001>
module attributes {stable_mosaic.version = 11 : i64} {
  func.func @_last_octave_kernel(%arg0: i32, %arg1: memref<2x16x256xbf16, #tpu.memory_space<vmem>>, %arg2: memref<2x16x64xbf16, #tpu.memory_space<vmem>>, %arg3: memref<8x144xbf16, #tpu.memory_space<vmem>>, %arg4: memref<8x144xbf16, #tpu.memory_space<vmem>>, %arg5: memref<2x256xbf16, #tpu.memory_space<vmem>>, %arg6: memref<2x64xbf16, #tpu.memory_space<vmem>>, %arg7: memref<64x256xf32, #tpu.memory_space<vmem>>, %arg8: memref<2x8x256xf32, #tpu.memory_space<vmem>>, %arg9: memref<2x16x512xbf16, #tpu.memory_space<vmem>>, %arg10: memref<2x16x256xbf16, #tpu.memory_space<vmem>>, %arg11: memref<144x512xbf16, #tpu.memory_space<vmem>>, %arg12: memref<144x128xbf16, #tpu.memory_space<vmem>>) attributes {dimension_semantics = [#tpu.dimension_semantics<parallel>], iteration_bounds = array<i64: 2>, scalar_prefetch = 0 : i64, scratch_operands = 4 : i64, tpu.core_type = #tpu.core_type<tc>, window_params = [{transform_indices = @transform_0, window_bounds = array<i64: 2, 16, 256>}, {transform_indices = @transform_1, window_bounds = array<i64: 2, 16, 64>}, {pipeline_mode = #tpu.pipeline_mode<synchronous>, transform_indices = @transform_2, window_bounds = array<i64: 8, 144>}, {pipeline_mode = #tpu.pipeline_mode<synchronous>, transform_indices = @transform_3, window_bounds = array<i64: 8, 144>}, {pipeline_mode = #tpu.pipeline_mode<synchronous>, transform_indices = @transform_4, window_bounds = array<i64: 2, 256>}, {pipeline_mode = #tpu.pipeline_mode<synchronous>, transform_indices = @transform_5, window_bounds = array<i64: 2, 64>}, {pipeline_mode = #tpu.pipeline_mode<synchronous>, transform_indices = @transform_6, window_bounds = array<i64: 64, 256>}, {transform_indices = @transform_7, window_bounds = array<i64: 2, 8, 256>}]} {
    %cst = arith.constant 0.000000e+00 : bf16
    %0 = vector.broadcast %cst : bf16 to vector<2x16x128xbf16>
    %c0 = arith.constant 0 : index
    %c0_0 = arith.constant 0 : index
    %c0_1 = arith.constant 0 : index
    %1 = vector.load %arg9[%c0, %c0_0, %c0_1] : memref<2x16x512xbf16, #tpu.memory_space<vmem>>, vector<2x16x128xbf16>
    tpu.vector_store %arg9[%c0, %c0_0, %c0_1], %0 {strides = array<i32>} : memref<2x16x512xbf16, #tpu.memory_space<vmem>>, vector<2x16x128xbf16>,
    %cst_2 = arith.constant 0.000000e+00 : bf16
    %2 = vector.broadcast %cst_2 : bf16 to vector<2x16x128xbf16>
    %c0_3 = arith.constant 0 : index
    %c0_4 = arith.constant 0 : index
    %c384 = arith.constant 384 : index
    %3 = vector.load %arg9[%c0_3, %c0_4, %c384] : memref<2x16x512xbf16, #tpu.memory_space<vmem>>, vector<2x16x128xbf16>
    tpu.vector_store %arg9[%c0_3, %c0_4, %c384], %2 {strides = array<i32>} : memref<2x16x512xbf16, #tpu.memory_space<vmem>>, vector<2x16x128xbf16>,
    %c0_5 = arith.constant 0 : index
    %c0_6 = arith.constant 0 : index
    %4 = vector.load %arg5[%c0_5, %c0_6] : memref<2x256xbf16, #tpu.memory_space<vmem>>, vector<1x256xbf16>
    %c1 = arith.constant 1 : index
    %c0_7 = arith.constant 0 : index
    %5 = vector.load %arg5[%c1, %c0_7] : memref<2x256xbf16, #tpu.memory_space<vmem>>, vector<1x256xbf16>
    %c0_8 = arith.constant 0 : index
    %c0_9 = arith.constant 0 : index
    %c0_10 = arith.constant 0 : index
    %6 = vector.load %arg1[%c0_8, %c0_9, %c0_10] : memref<2x16x256xbf16, #tpu.memory_space<vmem>>, vector<1x16x256xbf16>
    %7 = vector.shape_cast %6 : vector<1x16x256xbf16> to vector<16x256xbf16>
    %c0_11 = arith.constant 0 : index
    %c0_12 = arith.constant 0 : index
    %c128 = arith.constant 128 : index
    %8 = vector.load %arg9[%c0_11, %c0_12, %c128] : memref<2x16x512xbf16, #tpu.memory_space<vmem>>, vector<1x16x256xbf16>
    %9 = vector.shape_cast %8 : vector<1x16x256xbf16> to vector<16x256xbf16>
    %10 = vector.shape_cast %7 : vector<16x256xbf16> to vector<1x16x256xbf16>
    tpu.vector_store %arg9[%c0_11, %c0_12, %c128], %10 {strides = array<i32>} : memref<2x16x512xbf16, #tpu.memory_space<vmem>>, vector<1x16x256xbf16>,
    %c0_13 = arith.constant 0 : index
    %c0_14 = arith.constant 0 : index
    %c111 = arith.constant 111 : index
    %11 = vector.load %arg9[%c0_13, %c0_14, %c111] : memref<2x16x512xbf16, #tpu.memory_space<vmem>>, vector<1x16x256xbf16>
    %12 = vector.shape_cast %11 : vector<1x16x256xbf16> to vector<16x256xbf16>
    %13 = vector.broadcast %4 : vector<1x256xbf16> to vector<16x256xbf16>
    %14 = arith.mulf %12, %13 : vector<16x256xbf16>
    %c0_15 = arith.constant 0 : index
    %c0_16 = arith.constant 0 : index
    %15 = vector.load %arg11[%c0_15, %c0_16] : memref<144x512xbf16, #tpu.memory_space<vmem>>, vector<16x256xbf16>
    tpu.vector_store %arg11[%c0_15, %c0_16], %14 {strides = array<i32>} : memref<144x512xbf16, #tpu.memory_space<vmem>>, vector<16x256xbf16>,
    %c0_17 = arith.constant 0 : index
    %c0_18 = arith.constant 0 : index
    %c112 = arith.constant 112 : index
    %16 = vector.load %arg9[%c0_17, %c0_18, %c112] : memref<2x16x512xbf16, #tpu.memory_space<vmem>>, vector<1x16x256xbf16>
    %17 = vector.shape_cast %16 : vector<1x16x256xbf16> to vector<16x256xbf16>
    %c16 = arith.constant 16 : index
    %c0_19 = arith.constant 0 : index
    %18 = vector.load %arg11[%c16, %c0_19] : memref<144x512xbf16, #tpu.memory_space<vmem>>, vector<16x256xbf16>
    tpu.vector_store %arg11[%c16, %c0_19], %17 {strides = array<i32>} : memref<144x512xbf16, #tpu.memory_space<vmem>>, vector<16x256xbf16>,
    %c0_20 = arith.constant 0 : index
    %c0_21 = arith.constant 0 : index
    %c113 = arith.constant 113 : index
    %19 = vector.load %arg9[%c0_20, %c0_21, %c113] : memref<2x16x512xbf16, #tpu.memory_space<vmem>>, vector<1x16x256xbf16>
    %20 = vector.shape_cast %19 : vector<1x16x256xbf16> to vector<16x256xbf16>
    %21 = vector.broadcast %5 : vector<1x256xbf16> to vector<16x256xbf16>
    %22 = arith.mulf %20, %21 : vector<16x256xbf16>
    %c32 = arith.constant 32 : index
    %c0_22 = arith.constant 0 : index
    %23 = vector.load %arg11[%c32, %c0_22] : memref<144x512xbf16, #tpu.memory_space<vmem>>, vector<16x256xbf16>
    tpu.vector_store %arg11[%c32, %c0_22], %22 {strides = array<i32>} : memref<144x512xbf16, #tpu.memory_space<vmem>>, vector<16x256xbf16>,
    %c0_23 = arith.constant 0 : index
    %c0_24 = arith.constant 0 : index
    %c127 = arith.constant 127 : index
    %24 = vector.load %arg9[%c0_23, %c0_24, %c127] : memref<2x16x512xbf16, #tpu.memory_space<vmem>>, vector<1x16x256xbf16>
    %25 = vector.shape_cast %24 : vector<1x16x256xbf16> to vector<16x256xbf16>
    %26 = vector.broadcast %4 : vector<1x256xbf16> to vector<16x256xbf16>
    %27 = arith.mulf %25, %26 : vector<16x256xbf16>
    %c48 = arith.constant 48 : index
    %c0_25 = arith.constant 0 : index
    %28 = vector.load %arg11[%c48, %c0_25] : memref<144x512xbf16, #tpu.memory_space<vmem>>, vector<16x256xbf16>
    tpu.vector_store %arg11[%c48, %c0_25], %27 {strides = array<i32>} : memref<144x512xbf16, #tpu.memory_space<vmem>>, vector<16x256xbf16>,
    %c0_26 = arith.constant 0 : index
    %c0_27 = arith.constant 0 : index
    %c128_28 = arith.constant 128 : index
    %29 = vector.load %arg9[%c0_26, %c0_27, %c128_28] : memref<2x16x512xbf16, #tpu.memory_space<vmem>>, vector<1x16x256xbf16>
    %30 = vector.shape_cast %29 : vector<1x16x256xbf16> to vector<16x256xbf16>
    %c64 = arith.constant 64 : index
    %c0_29 = arith.constant 0 : index
    %31 = vector.load %arg11[%c64, %c0_29] : memref<144x512xbf16, #tpu.memory_space<vmem>>, vector<16x256xbf16>
    tpu.vector_store %arg11[%c64, %c0_29], %30 {strides = array<i32>} : memref<144x512xbf16, #tpu.memory_space<vmem>>, vector<16x256xbf16>,
    %c0_30 = arith.constant 0 : index
    %c0_31 = arith.constant 0 : index
    %c129 = arith.constant 129 : index
    %32 = vector.load %arg9[%c0_30, %c0_31, %c129] : memref<2x16x512xbf16, #tpu.memory_space<vmem>>, vector<1x16x256xbf16>
    %33 = vector.shape_cast %32 : vector<1x16x256xbf16> to vector<16x256xbf16>
    %34 = vector.broadcast %5 : vector<1x256xbf16> to vector<16x256xbf16>
    %35 = arith.mulf %33, %34 : vector<16x256xbf16>
    %c80 = arith.constant 80 : index
    %c0_32 = arith.constant 0 : index
    %36 = vector.load %arg11[%c80, %c0_32] : memref<144x512xbf16, #tpu.memory_space<vmem>>, vector<16x256xbf16>
    tpu.vector_store %arg11[%c80, %c0_32], %35 {strides = array<i32>} : memref<144x512xbf16, #tpu.memory_space<vmem>>, vector<16x256xbf16>,
    %c0_33 = arith.constant 0 : index
    %c0_34 = arith.constant 0 : index
    %c143 = arith.constant 143 : index
    %37 = vector.load %arg9[%c0_33, %c0_34, %c143] : memref<2x16x512xbf16, #tpu.memory_space<vmem>>, vector<1x16x256xbf16>
    %38 = vector.shape_cast %37 : vector<1x16x256xbf16> to vector<16x256xbf16>
    %39 = vector.broadcast %4 : vector<1x256xbf16> to vector<16x256xbf16>
    %40 = arith.mulf %38, %39 : vector<16x256xbf16>
    %c96 = arith.constant 96 : index
    %c0_35 = arith.constant 0 : index
    %41 = vector.load %arg11[%c96, %c0_35] : memref<144x512xbf16, #tpu.memory_space<vmem>>, vector<16x256xbf16>
    tpu.vector_store %arg11[%c96, %c0_35], %40 {strides = array<i32>} : memref<144x512xbf16, #tpu.memory_space<vmem>>, vector<16x256xbf16>,
    %c0_36 = arith.constant 0 : index
    %c0_37 = arith.constant 0 : index
    %c144 = arith.constant 144 : index
    %42 = vector.load %arg9[%c0_36, %c0_37, %c144] : memref<2x16x512xbf16, #tpu.memory_space<vmem>>, vector<1x16x256xbf16>
    %43 = vector.shape_cast %42 : vector<1x16x256xbf16> to vector<16x256xbf16>
    %c112_38 = arith.constant 112 : index
    %c0_39 = arith.constant 0 : index
    %44 = vector.load %arg11[%c112_38, %c0_39] : memref<144x512xbf16, #tpu.memory_space<vmem>>, vector<16x256xbf16>
    tpu.vector_store %arg11[%c112_38, %c0_39], %43 {strides = array<i32>} : memref<144x512xbf16, #tpu.memory_space<vmem>>, vector<16x256xbf16>,
    %c0_40 = arith.constant 0 : index
    %c0_41 = arith.constant 0 : index
    %c145 = arith.constant 145 : index
    %45 = vector.load %arg9[%c0_40, %c0_41, %c145] : memref<2x16x512xbf16, #tpu.memory_space<vmem>>, vector<1x16x256xbf16>
    %46 = vector.shape_cast %45 : vector<1x16x256xbf16> to vector<16x256xbf16>
    %47 = vector.broadcast %5 : vector<1x256xbf16> to vector<16x256xbf16>
    %48 = arith.mulf %46, %47 : vector<16x256xbf16>
    %c128_42 = arith.constant 128 : index
    %c0_43 = arith.constant 0 : index
    %49 = vector.load %arg11[%c128_42, %c0_43] : memref<144x512xbf16, #tpu.memory_space<vmem>>, vector<16x256xbf16>
    tpu.vector_store %arg11[%c128_42, %c0_43], %48 {strides = array<i32>} : memref<144x512xbf16, #tpu.memory_space<vmem>>, vector<16x256xbf16>,
    %c1_44 = arith.constant 1 : index
    %c0_45 = arith.constant 0 : index
    %c0_46 = arith.constant 0 : index
    %50 = vector.load %arg1[%c1_44, %c0_45, %c0_46] : memref<2x16x256xbf16, #tpu.memory_space<vmem>>, vector<1x16x256xbf16>
    %51 = vector.shape_cast %50 : vector<1x16x256xbf16> to vector<16x256xbf16>
    %c1_47 = arith.constant 1 : index
    %c0_48 = arith.constant 0 : index
    %c128_49 = arith.constant 128 : index
    %52 = vector.load %arg9[%c1_47, %c0_48, %c128_49] : memref<2x16x512xbf16, #tpu.memory_space<vmem>>, vector<1x16x256xbf16>
    %53 = vector.shape_cast %52 : vector<1x16x256xbf16> to vector<16x256xbf16>
    %54 = vector.shape_cast %51 : vector<16x256xbf16> to vector<1x16x256xbf16>
    tpu.vector_store %arg9[%c1_47, %c0_48, %c128_49], %54 {strides = array<i32>} : memref<2x16x512xbf16, #tpu.memory_space<vmem>>, vector<1x16x256xbf16>,
    %c1_50 = arith.constant 1 : index
    %c0_51 = arith.constant 0 : index
    %c111_52 = arith.constant 111 : index
    %55 = vector.load %arg9[%c1_50, %c0_51, %c111_52] : memref<2x16x512xbf16, #tpu.memory_space<vmem>>, vector<1x16x256xbf16>
    %56 = vector.shape_cast %55 : vector<1x16x256xbf16> to vector<16x256xbf16>
    %57 = vector.broadcast %4 : vector<1x256xbf16> to vector<16x256xbf16>
    %58 = arith.mulf %56, %57 : vector<16x256xbf16>
    %c0_53 = arith.constant 0 : index
    %c256 = arith.constant 256 : index
    %59 = vector.load %arg11[%c0_53, %c256] : memref<144x512xbf16, #tpu.memory_space<vmem>>, vector<16x256xbf16>
    tpu.vector_store %arg11[%c0_53, %c256], %58 {strides = array<i32>} : memref<144x512xbf16, #tpu.memory_space<vmem>>, vector<16x256xbf16>,
    %c1_54 = arith.constant 1 : index
    %c0_55 = arith.constant 0 : index
    %c112_56 = arith.constant 112 : index
    %60 = vector.load %arg9[%c1_54, %c0_55, %c112_56] : memref<2x16x512xbf16, #tpu.memory_space<vmem>>, vector<1x16x256xbf16>
    %61 = vector.shape_cast %60 : vector<1x16x256xbf16> to vector<16x256xbf16>
    %c16_57 = arith.constant 16 : index
    %c256_58 = arith.constant 256 : index
    %62 = vector.load %arg11[%c16_57, %c256_58] : memref<144x512xbf16, #tpu.memory_space<vmem>>, vector<16x256xbf16>
    tpu.vector_store %arg11[%c16_57, %c256_58], %61 {strides = array<i32>} : memref<144x512xbf16, #tpu.memory_space<vmem>>, vector<16x256xbf16>,
    %c1_59 = arith.constant 1 : index
    %c0_60 = arith.constant 0 : index
    %c113_61 = arith.constant 113 : index
    %63 = vector.load %arg9[%c1_59, %c0_60, %c113_61] : memref<2x16x512xbf16, #tpu.memory_space<vmem>>, vector<1x16x256xbf16>
    %64 = vector.shape_cast %63 : vector<1x16x256xbf16> to vector<16x256xbf16>
    %65 = vector.broadcast %5 : vector<1x256xbf16> to vector<16x256xbf16>
    %66 = arith.mulf %64, %65 : vector<16x256xbf16>
    %c32_62 = arith.constant 32 : index
    %c256_63 = arith.constant 256 : index
    %67 = vector.load %arg11[%c32_62, %c256_63] : memref<144x512xbf16, #tpu.memory_space<vmem>>, vector<16x256xbf16>
    tpu.vector_store %arg11[%c32_62, %c256_63], %66 {strides = array<i32>} : memref<144x512xbf16, #tpu.memory_space<vmem>>, vector<16x256xbf16>,
    %c1_64 = arith.constant 1 : index
    %c0_65 = arith.constant 0 : index
    %c127_66 = arith.constant 127 : index
    %68 = vector.load %arg9[%c1_64, %c0_65, %c127_66] : memref<2x16x512xbf16, #tpu.memory_space<vmem>>, vector<1x16x256xbf16>
    %69 = vector.shape_cast %68 : vector<1x16x256xbf16> to vector<16x256xbf16>
    %70 = vector.broadcast %4 : vector<1x256xbf16> to vector<16x256xbf16>
    %71 = arith.mulf %69, %70 : vector<16x256xbf16>
    %c48_67 = arith.constant 48 : index
    %c256_68 = arith.constant 256 : index
    %72 = vector.load %arg11[%c48_67, %c256_68] : memref<144x512xbf16, #tpu.memory_space<vmem>>, vector<16x256xbf16>
    tpu.vector_store %arg11[%c48_67, %c256_68], %71 {strides = array<i32>} : memref<144x512xbf16, #tpu.memory_space<vmem>>, vector<16x256xbf16>,
    %c1_69 = arith.constant 1 : index
    %c0_70 = arith.constant 0 : index
    %c128_71 = arith.constant 128 : index
    %73 = vector.load %arg9[%c1_69, %c0_70, %c128_71] : memref<2x16x512xbf16, #tpu.memory_space<vmem>>, vector<1x16x256xbf16>
    %74 = vector.shape_cast %73 : vector<1x16x256xbf16> to vector<16x256xbf16>
    %c64_72 = arith.constant 64 : index
    %c256_73 = arith.constant 256 : index
    %75 = vector.load %arg11[%c64_72, %c256_73] : memref<144x512xbf16, #tpu.memory_space<vmem>>, vector<16x256xbf16>
    tpu.vector_store %arg11[%c64_72, %c256_73], %74 {strides = array<i32>} : memref<144x512xbf16, #tpu.memory_space<vmem>>, vector<16x256xbf16>,
    %c1_74 = arith.constant 1 : index
    %c0_75 = arith.constant 0 : index
    %c129_76 = arith.constant 129 : index
    %76 = vector.load %arg9[%c1_74, %c0_75, %c129_76] : memref<2x16x512xbf16, #tpu.memory_space<vmem>>, vector<1x16x256xbf16>
    %77 = vector.shape_cast %76 : vector<1x16x256xbf16> to vector<16x256xbf16>
    %78 = vector.broadcast %5 : vector<1x256xbf16> to vector<16x256xbf16>
    %79 = arith.mulf %77, %78 : vector<16x256xbf16>
    %c80_77 = arith.constant 80 : index
    %c256_78 = arith.constant 256 : index
    %80 = vector.load %arg11[%c80_77, %c256_78] : memref<144x512xbf16, #tpu.memory_space<vmem>>, vector<16x256xbf16>
    tpu.vector_store %arg11[%c80_77, %c256_78], %79 {strides = array<i32>} : memref<144x512xbf16, #tpu.memory_space<vmem>>, vector<16x256xbf16>,
    %c1_79 = arith.constant 1 : index
    %c0_80 = arith.constant 0 : index
    %c143_81 = arith.constant 143 : index
    %81 = vector.load %arg9[%c1_79, %c0_80, %c143_81] : memref<2x16x512xbf16, #tpu.memory_space<vmem>>, vector<1x16x256xbf16>
    %82 = vector.shape_cast %81 : vector<1x16x256xbf16> to vector<16x256xbf16>
    %83 = vector.broadcast %4 : vector<1x256xbf16> to vector<16x256xbf16>
    %84 = arith.mulf %82, %83 : vector<16x256xbf16>
    %c96_82 = arith.constant 96 : index
    %c256_83 = arith.constant 256 : index
    %85 = vector.load %arg11[%c96_82, %c256_83] : memref<144x512xbf16, #tpu.memory_space<vmem>>, vector<16x256xbf16>
    tpu.vector_store %arg11[%c96_82, %c256_83], %84 {strides = array<i32>} : memref<144x512xbf16, #tpu.memory_space<vmem>>, vector<16x256xbf16>,
    %c1_84 = arith.constant 1 : index
    %c0_85 = arith.constant 0 : index
    %c144_86 = arith.constant 144 : index
    %86 = vector.load %arg9[%c1_84, %c0_85, %c144_86] : memref<2x16x512xbf16, #tpu.memory_space<vmem>>, vector<1x16x256xbf16>
    %87 = vector.shape_cast %86 : vector<1x16x256xbf16> to vector<16x256xbf16>
    %c112_87 = arith.constant 112 : index
    %c256_88 = arith.constant 256 : index
    %88 = vector.load %arg11[%c112_87, %c256_88] : memref<144x512xbf16, #tpu.memory_space<vmem>>, vector<16x256xbf16>
    tpu.vector_store %arg11[%c112_87, %c256_88], %87 {strides = array<i32>} : memref<144x512xbf16, #tpu.memory_space<vmem>>, vector<16x256xbf16>,
    %c1_89 = arith.constant 1 : index
    %c0_90 = arith.constant 0 : index
    %c145_91 = arith.constant 145 : index
    %89 = vector.load %arg9[%c1_89, %c0_90, %c145_91] : memref<2x16x512xbf16, #tpu.memory_space<vmem>>, vector<1x16x256xbf16>
    %90 = vector.shape_cast %89 : vector<1x16x256xbf16> to vector<16x256xbf16>
    %91 = vector.broadcast %5 : vector<1x256xbf16> to vector<16x256xbf16>
    %92 = arith.mulf %90, %91 : vector<16x256xbf16>
    %c128_92 = arith.constant 128 : index
    %c256_93 = arith.constant 256 : index
    %93 = vector.load %arg11[%c128_92, %c256_93] : memref<144x512xbf16, #tpu.memory_space<vmem>>, vector<16x256xbf16>
    tpu.vector_store %arg11[%c128_92, %c256_93], %92 {strides = array<i32>} : memref<144x512xbf16, #tpu.memory_space<vmem>>, vector<16x256xbf16>,
    %cst_94 = arith.constant 0.000000e+00 : bf16
    %94 = vector.broadcast %cst_94 : bf16 to vector<2x16x128xbf16>
    %c0_95 = arith.constant 0 : index
    %c0_96 = arith.constant 0 : index
    %c0_97 = arith.constant 0 : index
    %95 = vector.load %arg10[%c0_95, %c0_96, %c0_97] : memref<2x16x256xbf16, #tpu.memory_space<vmem>>, vector<2x16x128xbf16>
    tpu.vector_store %arg10[%c0_95, %c0_96, %c0_97], %94 {strides = array<i32>} : memref<2x16x256xbf16, #tpu.memory_space<vmem>>, vector<2x16x128xbf16>,
    %cst_98 = arith.constant 0.000000e+00 : bf16
    %96 = vector.broadcast %cst_98 : bf16 to vector<2x16x64xbf16>
    %c0_99 = arith.constant 0 : index
    %c0_100 = arith.constant 0 : index
    %c192 = arith.constant 192 : index
    %97 = vector.load %arg10[%c0_99, %c0_100, %c192] : memref<2x16x256xbf16, #tpu.memory_space<vmem>>, vector<2x16x64xbf16>
    tpu.vector_store %arg10[%c0_99, %c0_100, %c192], %96 {strides = array<i32>} : memref<2x16x256xbf16, #tpu.memory_space<vmem>>, vector<2x16x64xbf16>,
    %c0_101 = arith.constant 0 : index
    %c0_102 = arith.constant 0 : index
    %98 = vector.load %arg6[%c0_101, %c0_102] : memref<2x64xbf16, #tpu.memory_space<vmem>>, vector<1x64xbf16>
    %c1_103 = arith.constant 1 : index
    %c0_104 = arith.constant 0 : index
    %99 = vector.load %arg6[%c1_103, %c0_104] : memref<2x64xbf16, #tpu.memory_space<vmem>>, vector<1x64xbf16>
    %c0_105 = arith.constant 0 : index
    %c0_106 = arith.constant 0 : index
    %c0_107 = arith.constant 0 : index
    %100 = vector.load %arg2[%c0_105, %c0_106, %c0_107] : memref<2x16x64xbf16, #tpu.memory_space<vmem>>, vector<1x16x64xbf16>
    %101 = vector.shape_cast %100 : vector<1x16x64xbf16> to vector<16x64xbf16>
    %c0_108 = arith.constant 0 : index
    %c0_109 = arith.constant 0 : index
    %c128_110 = arith.constant 128 : index
    %102 = vector.load %arg10[%c0_108, %c0_109, %c128_110] : memref<2x16x256xbf16, #tpu.memory_space<vmem>>, vector<1x16x64xbf16>
    %103 = vector.shape_cast %102 : vector<1x16x64xbf16> to vector<16x64xbf16>
    %104 = vector.shape_cast %101 : vector<16x64xbf16> to vector<1x16x64xbf16>
    tpu.vector_store %arg10[%c0_108, %c0_109, %c128_110], %104 {strides = array<i32>} : memref<2x16x256xbf16, #tpu.memory_space<vmem>>, vector<1x16x64xbf16>,
    %c0_111 = arith.constant 0 : index
    %c0_112 = arith.constant 0 : index
    %c119 = arith.constant 119 : index
    %105 = vector.load %arg10[%c0_111, %c0_112, %c119] : memref<2x16x256xbf16, #tpu.memory_space<vmem>>, vector<1x16x64xbf16>
    %106 = vector.shape_cast %105 : vector<1x16x64xbf16> to vector<16x64xbf16>
    %107 = vector.broadcast %98 : vector<1x64xbf16> to vector<16x64xbf16>
    %108 = arith.mulf %106, %107 : vector<16x64xbf16>
    %c0_113 = arith.constant 0 : index
    %c0_114 = arith.constant 0 : index
    %109 = vector.load %arg12[%c0_113, %c0_114] : memref<144x128xbf16, #tpu.memory_space<vmem>>, vector<16x64xbf16>
    tpu.vector_store %arg12[%c0_113, %c0_114], %108 {strides = array<i32>} : memref<144x128xbf16, #tpu.memory_space<vmem>>, vector<16x64xbf16>,
    %c0_115 = arith.constant 0 : index
    %c0_116 = arith.constant 0 : index
    %c120 = arith.constant 120 : index
    %110 = vector.load %arg10[%c0_115, %c0_116, %c120] : memref<2x16x256xbf16, #tpu.memory_space<vmem>>, vector<1x16x64xbf16>
    %111 = vector.shape_cast %110 : vector<1x16x64xbf16> to vector<16x64xbf16>
    %c16_117 = arith.constant 16 : index
    %c0_118 = arith.constant 0 : index
    %112 = vector.load %arg12[%c16_117, %c0_118] : memref<144x128xbf16, #tpu.memory_space<vmem>>, vector<16x64xbf16>
    tpu.vector_store %arg12[%c16_117, %c0_118], %111 {strides = array<i32>} : memref<144x128xbf16, #tpu.memory_space<vmem>>, vector<16x64xbf16>,
    %c0_119 = arith.constant 0 : index
    %c0_120 = arith.constant 0 : index
    %c121 = arith.constant 121 : index
    %113 = vector.load %arg10[%c0_119, %c0_120, %c121] : memref<2x16x256xbf16, #tpu.memory_space<vmem>>, vector<1x16x64xbf16>
    %114 = vector.shape_cast %113 : vector<1x16x64xbf16> to vector<16x64xbf16>
    %115 = vector.broadcast %99 : vector<1x64xbf16> to vector<16x64xbf16>
    %116 = arith.mulf %114, %115 : vector<16x64xbf16>
    %c32_121 = arith.constant 32 : index
    %c0_122 = arith.constant 0 : index
    %117 = vector.load %arg12[%c32_121, %c0_122] : memref<144x128xbf16, #tpu.memory_space<vmem>>, vector<16x64xbf16>
    tpu.vector_store %arg12[%c32_121, %c0_122], %116 {strides = array<i32>} : memref<144x128xbf16, #tpu.memory_space<vmem>>, vector<16x64xbf16>,
    %c0_123 = arith.constant 0 : index
    %c0_124 = arith.constant 0 : index
    %c127_125 = arith.constant 127 : index
    %118 = vector.load %arg10[%c0_123, %c0_124, %c127_125] : memref<2x16x256xbf16, #tpu.memory_space<vmem>>, vector<1x16x64xbf16>
    %119 = vector.shape_cast %118 : vector<1x16x64xbf16> to vector<16x64xbf16>
    %120 = vector.broadcast %98 : vector<1x64xbf16> to vector<16x64xbf16>
    %121 = arith.mulf %119, %120 : vector<16x64xbf16>
    %c48_126 = arith.constant 48 : index
    %c0_127 = arith.constant 0 : index
    %122 = vector.load %arg12[%c48_126, %c0_127] : memref<144x128xbf16, #tpu.memory_space<vmem>>, vector<16x64xbf16>
    tpu.vector_store %arg12[%c48_126, %c0_127], %121 {strides = array<i32>} : memref<144x128xbf16, #tpu.memory_space<vmem>>, vector<16x64xbf16>,
    %c0_128 = arith.constant 0 : index
    %c0_129 = arith.constant 0 : index
    %c128_130 = arith.constant 128 : index
    %123 = vector.load %arg10[%c0_128, %c0_129, %c128_130] : memref<2x16x256xbf16, #tpu.memory_space<vmem>>, vector<1x16x64xbf16>
    %124 = vector.shape_cast %123 : vector<1x16x64xbf16> to vector<16x64xbf16>
    %c64_131 = arith.constant 64 : index
    %c0_132 = arith.constant 0 : index
    %125 = vector.load %arg12[%c64_131, %c0_132] : memref<144x128xbf16, #tpu.memory_space<vmem>>, vector<16x64xbf16>
    tpu.vector_store %arg12[%c64_131, %c0_132], %124 {strides = array<i32>} : memref<144x128xbf16, #tpu.memory_space<vmem>>, vector<16x64xbf16>,
    %c0_133 = arith.constant 0 : index
    %c0_134 = arith.constant 0 : index
    %c129_135 = arith.constant 129 : index
    %126 = vector.load %arg10[%c0_133, %c0_134, %c129_135] : memref<2x16x256xbf16, #tpu.memory_space<vmem>>, vector<1x16x64xbf16>
    %127 = vector.shape_cast %126 : vector<1x16x64xbf16> to vector<16x64xbf16>
    %128 = vector.broadcast %99 : vector<1x64xbf16> to vector<16x64xbf16>
    %129 = arith.mulf %127, %128 : vector<16x64xbf16>
    %c80_136 = arith.constant 80 : index
    %c0_137 = arith.constant 0 : index
    %130 = vector.load %arg12[%c80_136, %c0_137] : memref<144x128xbf16, #tpu.memory_space<vmem>>, vector<16x64xbf16>
    tpu.vector_store %arg12[%c80_136, %c0_137], %129 {strides = array<i32>} : memref<144x128xbf16, #tpu.memory_space<vmem>>, vector<16x64xbf16>,
    %c0_138 = arith.constant 0 : index
    %c0_139 = arith.constant 0 : index
    %c135 = arith.constant 135 : index
    %131 = vector.load %arg10[%c0_138, %c0_139, %c135] : memref<2x16x256xbf16, #tpu.memory_space<vmem>>, vector<1x16x64xbf16>
    %132 = vector.shape_cast %131 : vector<1x16x64xbf16> to vector<16x64xbf16>
    %133 = vector.broadcast %98 : vector<1x64xbf16> to vector<16x64xbf16>
    %134 = arith.mulf %132, %133 : vector<16x64xbf16>
    %c96_140 = arith.constant 96 : index
    %c0_141 = arith.constant 0 : index
    %135 = vector.load %arg12[%c96_140, %c0_141] : memref<144x128xbf16, #tpu.memory_space<vmem>>, vector<16x64xbf16>
    tpu.vector_store %arg12[%c96_140, %c0_141], %134 {strides = array<i32>} : memref<144x128xbf16, #tpu.memory_space<vmem>>, vector<16x64xbf16>,
    %c0_142 = arith.constant 0 : index
    %c0_143 = arith.constant 0 : index
    %c136 = arith.constant 136 : index
    %136 = vector.load %arg10[%c0_142, %c0_143, %c136] : memref<2x16x256xbf16, #tpu.memory_space<vmem>>, vector<1x16x64xbf16>
    %137 = vector.shape_cast %136 : vector<1x16x64xbf16> to vector<16x64xbf16>
    %c112_144 = arith.constant 112 : index
    %c0_145 = arith.constant 0 : index
    %138 = vector.load %arg12[%c112_144, %c0_145] : memref<144x128xbf16, #tpu.memory_space<vmem>>, vector<16x64xbf16>
    tpu.vector_store %arg12[%c112_144, %c0_145], %137 {strides = array<i32>} : memref<144x128xbf16, #tpu.memory_space<vmem>>, vector<16x64xbf16>,
    %c0_146 = arith.constant 0 : index
    %c0_147 = arith.constant 0 : index
    %c137 = arith.constant 137 : index
    %139 = vector.load %arg10[%c0_146, %c0_147, %c137] : memref<2x16x256xbf16, #tpu.memory_space<vmem>>, vector<1x16x64xbf16>
    %140 = vector.shape_cast %139 : vector<1x16x64xbf16> to vector<16x64xbf16>
    %141 = vector.broadcast %99 : vector<1x64xbf16> to vector<16x64xbf16>
    %142 = arith.mulf %140, %141 : vector<16x64xbf16>
    %c128_148 = arith.constant 128 : index
    %c0_149 = arith.constant 0 : index
    %143 = vector.load %arg12[%c128_148, %c0_149] : memref<144x128xbf16, #tpu.memory_space<vmem>>, vector<16x64xbf16>
    tpu.vector_store %arg12[%c128_148, %c0_149], %142 {strides = array<i32>} : memref<144x128xbf16, #tpu.memory_space<vmem>>, vector<16x64xbf16>,
    %c1_150 = arith.constant 1 : index
    %c0_151 = arith.constant 0 : index
    %c0_152 = arith.constant 0 : index
    %144 = vector.load %arg2[%c1_150, %c0_151, %c0_152] : memref<2x16x64xbf16, #tpu.memory_space<vmem>>, vector<1x16x64xbf16>
    %145 = vector.shape_cast %144 : vector<1x16x64xbf16> to vector<16x64xbf16>
    %c1_153 = arith.constant 1 : index
    %c0_154 = arith.constant 0 : index
    %c128_155 = arith.constant 128 : index
    %146 = vector.load %arg10[%c1_153, %c0_154, %c128_155] : memref<2x16x256xbf16, #tpu.memory_space<vmem>>, vector<1x16x64xbf16>
    %147 = vector.shape_cast %146 : vector<1x16x64xbf16> to vector<16x64xbf16>
    %148 = vector.shape_cast %145 : vector<16x64xbf16> to vector<1x16x64xbf16>
    tpu.vector_store %arg10[%c1_153, %c0_154, %c128_155], %148 {strides = array<i32>} : memref<2x16x256xbf16, #tpu.memory_space<vmem>>, vector<1x16x64xbf16>,
    %c1_156 = arith.constant 1 : index
    %c0_157 = arith.constant 0 : index
    %c119_158 = arith.constant 119 : index
    %149 = vector.load %arg10[%c1_156, %c0_157, %c119_158] : memref<2x16x256xbf16, #tpu.memory_space<vmem>>, vector<1x16x64xbf16>
    %150 = vector.shape_cast %149 : vector<1x16x64xbf16> to vector<16x64xbf16>
    %151 = vector.broadcast %98 : vector<1x64xbf16> to vector<16x64xbf16>
    %152 = arith.mulf %150, %151 : vector<16x64xbf16>
    %c0_159 = arith.constant 0 : index
    %c64_160 = arith.constant 64 : index
    %153 = vector.load %arg12[%c0_159, %c64_160] : memref<144x128xbf16, #tpu.memory_space<vmem>>, vector<16x64xbf16>
    tpu.vector_store %arg12[%c0_159, %c64_160], %152 {strides = array<i32>} : memref<144x128xbf16, #tpu.memory_space<vmem>>, vector<16x64xbf16>,
    %c1_161 = arith.constant 1 : index
    %c0_162 = arith.constant 0 : index
    %c120_163 = arith.constant 120 : index
    %154 = vector.load %arg10[%c1_161, %c0_162, %c120_163] : memref<2x16x256xbf16, #tpu.memory_space<vmem>>, vector<1x16x64xbf16>
    %155 = vector.shape_cast %154 : vector<1x16x64xbf16> to vector<16x64xbf16>
    %c16_164 = arith.constant 16 : index
    %c64_165 = arith.constant 64 : index
    %156 = vector.load %arg12[%c16_164, %c64_165] : memref<144x128xbf16, #tpu.memory_space<vmem>>, vector<16x64xbf16>
    tpu.vector_store %arg12[%c16_164, %c64_165], %155 {strides = array<i32>} : memref<144x128xbf16, #tpu.memory_space<vmem>>, vector<16x64xbf16>,
    %c1_166 = arith.constant 1 : index
    %c0_167 = arith.constant 0 : index
    %c121_168 = arith.constant 121 : index
    %157 = vector.load %arg10[%c1_166, %c0_167, %c121_168] : memref<2x16x256xbf16, #tpu.memory_space<vmem>>, vector<1x16x64xbf16>
    %158 = vector.shape_cast %157 : vector<1x16x64xbf16> to vector<16x64xbf16>
    %159 = vector.broadcast %99 : vector<1x64xbf16> to vector<16x64xbf16>
    %160 = arith.mulf %158, %159 : vector<16x64xbf16>
    %c32_169 = arith.constant 32 : index
    %c64_170 = arith.constant 64 : index
    %161 = vector.load %arg12[%c32_169, %c64_170] : memref<144x128xbf16, #tpu.memory_space<vmem>>, vector<16x64xbf16>
    tpu.vector_store %arg12[%c32_169, %c64_170], %160 {strides = array<i32>} : memref<144x128xbf16, #tpu.memory_space<vmem>>, vector<16x64xbf16>,
    %c1_171 = arith.constant 1 : index
    %c0_172 = arith.constant 0 : index
    %c127_173 = arith.constant 127 : index
    %162 = vector.load %arg10[%c1_171, %c0_172, %c127_173] : memref<2x16x256xbf16, #tpu.memory_space<vmem>>, vector<1x16x64xbf16>
    %163 = vector.shape_cast %162 : vector<1x16x64xbf16> to vector<16x64xbf16>
    %164 = vector.broadcast %98 : vector<1x64xbf16> to vector<16x64xbf16>
    %165 = arith.mulf %163, %164 : vector<16x64xbf16>
    %c48_174 = arith.constant 48 : index
    %c64_175 = arith.constant 64 : index
    %166 = vector.load %arg12[%c48_174, %c64_175] : memref<144x128xbf16, #tpu.memory_space<vmem>>, vector<16x64xbf16>
    tpu.vector_store %arg12[%c48_174, %c64_175], %165 {strides = array<i32>} : memref<144x128xbf16, #tpu.memory_space<vmem>>, vector<16x64xbf16>,
    %c1_176 = arith.constant 1 : index
    %c0_177 = arith.constant 0 : index
    %c128_178 = arith.constant 128 : index
    %167 = vector.load %arg10[%c1_176, %c0_177, %c128_178] : memref<2x16x256xbf16, #tpu.memory_space<vmem>>, vector<1x16x64xbf16>
    %168 = vector.shape_cast %167 : vector<1x16x64xbf16> to vector<16x64xbf16>
    %c64_179 = arith.constant 64 : index
    %c64_180 = arith.constant 64 : index
    %169 = vector.load %arg12[%c64_179, %c64_180] : memref<144x128xbf16, #tpu.memory_space<vmem>>, vector<16x64xbf16>
    tpu.vector_store %arg12[%c64_179, %c64_180], %168 {strides = array<i32>} : memref<144x128xbf16, #tpu.memory_space<vmem>>, vector<16x64xbf16>,
    %c1_181 = arith.constant 1 : index
    %c0_182 = arith.constant 0 : index
    %c129_183 = arith.constant 129 : index
    %170 = vector.load %arg10[%c1_181, %c0_182, %c129_183] : memref<2x16x256xbf16, #tpu.memory_space<vmem>>, vector<1x16x64xbf16>
    %171 = vector.shape_cast %170 : vector<1x16x64xbf16> to vector<16x64xbf16>
    %172 = vector.broadcast %99 : vector<1x64xbf16> to vector<16x64xbf16>
    %173 = arith.mulf %171, %172 : vector<16x64xbf16>
    %c80_184 = arith.constant 80 : index
    %c64_185 = arith.constant 64 : index
    %174 = vector.load %arg12[%c80_184, %c64_185] : memref<144x128xbf16, #tpu.memory_space<vmem>>, vector<16x64xbf16>
    tpu.vector_store %arg12[%c80_184, %c64_185], %173 {strides = array<i32>} : memref<144x128xbf16, #tpu.memory_space<vmem>>, vector<16x64xbf16>,
    %c1_186 = arith.constant 1 : index
    %c0_187 = arith.constant 0 : index
    %c135_188 = arith.constant 135 : index
    %175 = vector.load %arg10[%c1_186, %c0_187, %c135_188] : memref<2x16x256xbf16, #tpu.memory_space<vmem>>, vector<1x16x64xbf16>
    %176 = vector.shape_cast %175 : vector<1x16x64xbf16> to vector<16x64xbf16>
    %177 = vector.broadcast %98 : vector<1x64xbf16> to vector<16x64xbf16>
    %178 = arith.mulf %176, %177 : vector<16x64xbf16>
    %c96_189 = arith.constant 96 : index
    %c64_190 = arith.constant 64 : index
    %179 = vector.load %arg12[%c96_189, %c64_190] : memref<144x128xbf16, #tpu.memory_space<vmem>>, vector<16x64xbf16>
    tpu.vector_store %arg12[%c96_189, %c64_190], %178 {strides = array<i32>} : memref<144x128xbf16, #tpu.memory_space<vmem>>, vector<16x64xbf16>,
    %c1_191 = arith.constant 1 : index
    %c0_192 = arith.constant 0 : index
    %c136_193 = arith.constant 136 : index
    %180 = vector.load %arg10[%c1_191, %c0_192, %c136_193] : memref<2x16x256xbf16, #tpu.memory_space<vmem>>, vector<1x16x64xbf16>
    %181 = vector.shape_cast %180 : vector<1x16x64xbf16> to vector<16x64xbf16>
    %c112_194 = arith.constant 112 : index
    %c64_195 = arith.constant 64 : index
    %182 = vector.load %arg12[%c112_194, %c64_195] : memref<144x128xbf16, #tpu.memory_space<vmem>>, vector<16x64xbf16>
    tpu.vector_store %arg12[%c112_194, %c64_195], %181 {strides = array<i32>} : memref<144x128xbf16, #tpu.memory_space<vmem>>, vector<16x64xbf16>,
    %c1_196 = arith.constant 1 : index
    %c0_197 = arith.constant 0 : index
    %c137_198 = arith.constant 137 : index
    %183 = vector.load %arg10[%c1_196, %c0_197, %c137_198] : memref<2x16x256xbf16, #tpu.memory_space<vmem>>, vector<1x16x64xbf16>
    %184 = vector.shape_cast %183 : vector<1x16x64xbf16> to vector<16x64xbf16>
    %185 = vector.broadcast %99 : vector<1x64xbf16> to vector<16x64xbf16>
    %186 = arith.mulf %184, %185 : vector<16x64xbf16>
    %c128_199 = arith.constant 128 : index
    %c64_200 = arith.constant 64 : index
    %187 = vector.load %arg12[%c128_199, %c64_200] : memref<144x128xbf16, #tpu.memory_space<vmem>>, vector<16x64xbf16>
    tpu.vector_store %arg12[%c128_199, %c64_200], %186 {strides = array<i32>} : memref<144x128xbf16, #tpu.memory_space<vmem>>, vector<16x64xbf16>,
    %c0_201 = arith.constant 0 : index
    %c0_202 = arith.constant 0 : index
    %188 = vector.load %arg3[%c0_201, %c0_202] : memref<8x144xbf16, #tpu.memory_space<vmem>>, vector<8x144xbf16>
    %c0_203 = arith.constant 0 : index
    %c0_204 = arith.constant 0 : index
    %189 = vector.load %arg11[%c0_203, %c0_204] : memref<144x512xbf16, #tpu.memory_space<vmem>>, vector<144x512xbf16>
    %cst_205 = arith.constant dense<0.000000e+00> : vector<8x512xf32>
    %190 = tpu.matmul %188, %189, %cst_205 {dimension_numbers = #tpu.dot_dimension_numbers<[1], [0], [0], [1], [0, 0, 1, 1], [], []>} : vector<8x144xbf16>, vector<144x512xbf16>, vector<8x512xf32> -> vector<8x512xf32>
    %c0_206 = arith.constant 0 : index
    %c0_207 = arith.constant 0 : index
    %191 = vector.load %arg4[%c0_206, %c0_207] : memref<8x144xbf16, #tpu.memory_space<vmem>>, vector<8x144xbf16>
    %c0_208 = arith.constant 0 : index
    %c0_209 = arith.constant 0 : index
    %192 = vector.load %arg12[%c0_208, %c0_209] : memref<144x128xbf16, #tpu.memory_space<vmem>>, vector<144x128xbf16>
    %cst_210 = arith.constant dense<0.000000e+00> : vector<8x128xf32>
    %193 = tpu.matmul %191, %192, %cst_210 {dimension_numbers = #tpu.dot_dimension_numbers<[1], [0], [0], [1], [0, 0, 1, 1], [], []>} : vector<8x144xbf16>, vector<144x128xbf16>, vector<8x128xf32> -> vector<8x128xf32>
    %c0_211 = arith.constant 0 : index
    %c0_212 = arith.constant 0 : index
    %194 = vector.load %arg7[%c0_211, %c0_212] : memref<64x256xf32, #tpu.memory_space<vmem>>, vector<64x256xf32>
    %195 = vector.extract_strided_slice %193 {offsets = [0, 0], sizes = [8, 64], strides = [1, 1]} : vector<8x128xf32> to vector<8x64xf32>
    %cst_213 = arith.constant dense<0.000000e+00> : vector<8x256xf32>
    %196 = tpu.matmul %195, %194, %cst_213 {dimension_numbers = #tpu.dot_dimension_numbers<[1], [0], [0], [1], [0, 0, 1, 1], [], []>} : vector<8x64xf32>, vector<64x256xf32>, vector<8x256xf32> -> vector<8x256xf32>
    %197 = vector.extract_strided_slice %190 {offsets = [0, 0], sizes = [8, 256], strides = [1, 1]} : vector<8x512xf32> to vector<8x256xf32>
    %198 = arith.addf %197, %196 : vector<8x256xf32>
    %c0_214 = arith.constant 0 : index
    %c0_215 = arith.constant 0 : index
    %c0_216 = arith.constant 0 : index
    %199 = vector.load %arg8[%c0_214, %c0_215, %c0_216] : memref<2x8x256xf32, #tpu.memory_space<vmem>>, vector<1x8x256xf32>
    %200 = vector.shape_cast %199 : vector<1x8x256xf32> to vector<8x256xf32>
    %201 = vector.shape_cast %198 : vector<8x256xf32> to vector<1x8x256xf32>
    tpu.vector_store %arg8[%c0_214, %c0_215, %c0_216], %201 {strides = array<i32>} : memref<2x8x256xf32, #tpu.memory_space<vmem>>, vector<1x8x256xf32>,
    %202 = vector.extract_strided_slice %193 {offsets = [0, 64], sizes = [8, 64], strides = [1, 1]} : vector<8x128xf32> to vector<8x64xf32>
    %cst_217 = arith.constant dense<0.000000e+00> : vector<8x256xf32>
    %203 = tpu.matmul %202, %194, %cst_217 {dimension_numbers = #tpu.dot_dimension_numbers<[1], [0], [0], [1], [0, 0, 1, 1], [], []>} : vector<8x64xf32>, vector<64x256xf32>, vector<8x256xf32> -> vector<8x256xf32>
    %204 = vector.extract_strided_slice %190 {offsets = [0, 256], sizes = [8, 256], strides = [1, 1]} : vector<8x512xf32> to vector<8x256xf32>
    %205 = arith.addf %204, %203 : vector<8x256xf32>
    %c1_218 = arith.constant 1 : index
    %c0_219 = arith.constant 0 : index
    %c0_220 = arith.constant 0 : index
    %206 = vector.load %arg8[%c1_218, %c0_219, %c0_220] : memref<2x8x256xf32, #tpu.memory_space<vmem>>, vector<1x8x256xf32>
    %207 = vector.shape_cast %206 : vector<1x8x256xf32> to vector<8x256xf32>
    %208 = vector.shape_cast %205 : vector<8x256xf32> to vector<1x8x256xf32>
    tpu.vector_store %arg8[%c1_218, %c0_219, %c0_220], %208 {strides = array<i32>} : memref<2x8x256xf32, #tpu.memory_space<vmem>>, vector<1x8x256xf32>,
    return
  }
  func.func @transform_0(%arg0: i32) -> (i32, i32, i32) {
    %c0_i32 = arith.constant 0 : i32
    %c0_i32_0 = arith.constant 0 : i32
    %c0_i32_1 = arith.constant 0 : i32
    return %arg0, %c0_i32, %c0_i32_0 : i32, i32, i32
  }
  func.func @transform_1(%arg0: i32) -> (i32, i32, i32) {
    %c0_i32 = arith.constant 0 : i32
    %c0_i32_0 = arith.constant 0 : i32
    %c0_i32_1 = arith.constant 0 : i32
    return %arg0, %c0_i32, %c0_i32_0 : i32, i32, i32
  }
  func.func @transform_2(%arg0: i32) -> (i32, i32) {
    %c0_i32 = arith.constant 0 : i32
    %c0_i32_0 = arith.constant 0 : i32
    %c0_i32_1 = arith.constant 0 : i32
    return %c0_i32, %c0_i32_0 : i32, i32
  }
  func.func @transform_3(%arg0: i32) -> (i32, i32) {
    %c0_i32 = arith.constant 0 : i32
    %c0_i32_0 = arith.constant 0 : i32
    %c0_i32_1 = arith.constant 0 : i32
    return %c0_i32, %c0_i32_0 : i32, i32
  }
  func.func @transform_4(%arg0: i32) -> (i32, i32) {
    %c0_i32 = arith.constant 0 : i32
    %c0_i32_0 = arith.constant 0 : i32
    %c0_i32_1 = arith.constant 0 : i32
    return %c0_i32, %c0_i32_0 : i32, i32
  }
  func.func @transform_5(%arg0: i32) -> (i32, i32) {
    %c0_i32 = arith.constant 0 : i32
    %c0_i32_0 = arith.constant 0 : i32
    %c0_i32_1 = arith.constant 0 : i32
    return %c0_i32, %c0_i32_0 : i32, i32
  }
  func.func @transform_6(%arg0: i32) -> (i32, i32) {
    %c0_i32 = arith.constant 0 : i32
    %c0_i32_0 = arith.constant 0 : i32
    %c0_i32_1 = arith.constant 0 : i32
    return %c0_i32, %c0_i32_0 : i32, i32
  }
  func.func @transform_7(%arg0: i32) -> (i32, i32, i32) {
    %c0_i32 = arith.constant 0 : i32
    %c0_i32_0 = arith.constant 0 : i32
    %c0_i32_1 = arith.constant 0 : i32
    return %arg0, %c0_i32, %c0_i32_0 : i32, i32, i32
  }
}

</mosaic_0001>

<llo_original>
// kernel: last_octave_conv_pallas.1
$region0: #{last_octave_conv_pallas.1}
  #allocation0 [shape = 'u32[]', space=smem, size = 0x4, offset = 0x4, fixed_abs, tag = 'smem constant byte address 0x4 - core index']
  #allocation1 [shape = 'u32[144,128]{1,0:T(1,128)}', space=vmem, size = 0x12000, scoped, tag = 'internal scratch']
  #allocation2 [shape = 'bf16[2,16,512]{2,1,0:T(8,128)(2,1)}', space=vmem, size = 0x8000, scoped, tag = 'scratch operand']
  #allocation3 [shape = 'bf16[2,16,256]{2,1,0:T(8,128)(2,1)}', space=vmem, size = 0x4000, scoped, tag = 'scratch operand']
  #allocation4 [shape = 'bf16[144,512]{1,0:T(8,128)(2,1)}', space=vmem, size = 0x24000, scoped, tag = 'scratch operand']
  #allocation5 [shape = 'bf16[144,128]{1,0:T(8,128)(2,1)}', space=vmem, size = 0x9000, scoped, tag = 'scratch operand']
  %s0 = inlined_call_operand.vmem [shape: bf16[4,16,256], index: 0, kind: input, shape index: {}]
  %s1 = inlined_call_operand.vmem [shape: bf16[4,16,64], index: 1, kind: input, shape index: {}]
  %s2 = inlined_call_operand.vmem [shape: bf16[8,144], index: 2, kind: input, shape index: {}]
  %s3 = inlined_call_operand.vmem [shape: bf16[8,144], index: 3, kind: input, shape index: {}]
  %s4 = inlined_call_operand.vmem [shape: bf16[2,256], index: 4, kind: input, shape index: {}]
  %s5 = inlined_call_operand.vmem [shape: bf16[2,64], index: 5, kind: input, shape index: {}]
  %s6 = inlined_call_operand.vmem [shape: f32[64,256], index: 6, kind: input, shape index: {}]
  %s7 = inlined_call_operand.vmem [shape: f32[4,8,256], index: 7, kind: output, shape index: {}]
  %s8 = sld [smem:[#allocation0]]
  $region61: #{last_octave_conv_pallas.1} parent=0
    _
  %s10 = ssub.s32 1, %s8
  %s11 = scalar_select 0, %s10, %s8
  loop: start=0, step=1, limit=4
  $region2: #{last_octave_conv_pallas.1} parent=0 // loop_pre_header
    _
  $region3: #{last_octave_conv_pallas.1} parent=0 // loop_header
    %s13 = sphi 0, %s17
    %p14 = scmp.ge.s32.totalorder %s13, 4
    %s23 = sphi 0, %s25
    %s26 = sphi 0, %s23
    %s27 = sphi 0, %s26
    %s43 = sphi 0, %s27
    %s49 = sphi 0, %s51
    %s52 = sphi 0, %s49
    %s53 = sphi 0, %s52
    %s69 = sphi 0, %s53
    %s73 = sphi 0, %s73
    %s75 = sphi 0, %s73
    %s76 = sphi 0, %s75
    %s90 = sphi 0, %s76
    %s94 = sphi 0, %s94
    %s96 = sphi 0, %s94
    %s97 = sphi 0, %s96
    %s111 = sphi 0, %s97
    %s115 = sphi 0, %s115
    %s117 = sphi 0, %s115
    %s118 = sphi 0, %s117
    %s132 = sphi 0, %s118
    %s136 = sphi 0, %s136
    %s138 = sphi 0, %s136
    %s139 = sphi 0, %s138
    %s153 = sphi 0, %s139
    %s157 = sphi 0, %s157
    %s159 = sphi 0, %s157
    %s160 = sphi 0, %s159
    %s174 = sphi 0, %s160
    %s180 = sphi 0, %s182
    %s183 = sphi 0, %s180
    %s184 = sphi 0, %s183
    %s200 = sphi 0, %s184
  $region4: #{last_octave_conv_pallas.1} parent=0 // loop_header_branch
    %16 = sbr.rel (%p14) target = $region8
  $region5: #{last_octave_conv_pallas.1} parent=0 // loop_body
    %s18 = ssub.s32 %s13, 1
    %s19 = ssub.s32 %s13, 2
    %s20 = sadd.s32 %s13, 1
    %s21 = ssub.s32 %s13, %s20
    %p22 = scmp.eq.s32.totalorder %s21, 0
    %s24 = sadd.s32 %s23, 1
    %s25 = scalar_select %p22, %s23, %s24
    %p28 = pneg %p22
    %p29 = scmp.eq.s32.totalorder %s13, 1
    %p30 = por %p28, %p29
    %p31 = scmp.ne.s32.totalorder %s23, %s26
    %p32 = scmp.eq.s32.totalorder %s13, 0
    %p33 = por %p31, %p32
    %p34 = scmp.ne.s32.totalorder %s23, %s26
    %p35 = scmp.eq.s32.totalorder %s18, 1
    %p36 = por %p34, %p35
    %p37 = scmp.ne.s32.totalorder %s26, %s27
    %p38 = scmp.eq.s32.totalorder %s18, 0
    %p39 = por %p37, %p38
    %p40 = scmp.ne.s32.totalorder %s26, %s27
    %p41 = scmp.eq.s32.totalorder %s19, 1
    %p42 = por %p40, %p41
    %p44 = scmp.ne.s32.totalorder %s27, %s43
    %p45 = scmp.eq.s32.totalorder %s19, 0
    %p46 = por %p44, %p45
    %s47 = ssub.s32 %s13, %s20
    %p48 = scmp.eq.s32.totalorder %s47, 0
    %s50 = sadd.s32 %s49, 1
    %s51 = scalar_select %p48, %s49, %s50
    %p54 = pneg %p48
    %p55 = scmp.eq.s32.totalorder %s13, 1
    %p56 = por %p54, %p55
    %p57 = scmp.ne.s32.totalorder %s49, %s52
    %p58 = scmp.eq.s32.totalorder %s13, 0
    %p59 = por %p57, %p58
    %p60 = scmp.ne.s32.totalorder %s49, %s52
    %p61 = scmp.eq.s32.totalorder %s18, 1
    %p62 = por %p60, %p61
    %p63 = scmp.ne.s32.totalorder %s52, %s53
    %p64 = scmp.eq.s32.totalorder %s18, 0
    %p65 = por %p63, %p64
    %p66 = scmp.ne.s32.totalorder %s52, %s53
    %p67 = scmp.eq.s32.totalorder %s19, 1
    %p68 = por %p66, %p67
    %p70 = scmp.ne.s32.totalorder %s53, %s69
    %p71 = scmp.eq.s32.totalorder %s19, 0
    %p72 = por %p70, %p71
    %s74 = sadd.s32 %s73, 1
    %p77 = scmp.eq.s32.totalorder %s13, 1
    %p78 = scmp.ne.s32.totalorder %s73, %s75
    %p79 = scmp.eq.s32.totalorder %s13, 0
    %p80 = por %p78, %p79
    %p81 = scmp.ne.s32.totalorder %s73, %s75
    %p82 = scmp.eq.s32.totalorder %s18, 1
    %p83 = por %p81, %p82
    %p84 = scmp.ne.s32.totalorder %s75, %s76
    %p85 = scmp.eq.s32.totalorder %s18, 0
    %p86 = por %p84, %p85
    %p87 = scmp.ne.s32.totalorder %s75, %s76
    %p88 = scmp.eq.s32.totalorder %s19, 1
    %p89 = por %p87, %p88
    %p91 = scmp.ne.s32.totalorder %s76, %s90
    %p92 = scmp.eq.s32.totalorder %s19, 0
    %p93 = por %p91, %p92
    %s95 = sadd.s32 %s94, 1
    %p98 = scmp.eq.s32.totalorder %s13, 1
    %p99 = scmp.ne.s32.totalorder %s94, %s96
    %p100 = scmp.eq.s32.totalorder %s13, 0
    %p101 = por %p99, %p100
    %p102 = scmp.ne.s32.totalorder %s94, %s96
    %p103 = scmp.eq.s32.totalorder %s18, 1
    %p104 = por %p102, %p103
    %p105 = scmp.ne.s32.totalorder %s96, %s97
    %p106 = scmp.eq.s32.totalorder %s18, 0
    %p107 = por %p105, %p106
    %p108 = scmp.ne.s32.totalorder %s96, %s97
    %p109 = scmp.eq.s32.totalorder %s19, 1
    %p110 = por %p108, %p109
    %p112 = scmp.ne.s32.totalorder %s97, %s111
    %p113 = scmp.eq.s32.totalorder %s19, 0
    %p114 = por %p112, %p113
    %s116 = sadd.s32 %s115, 1
    %p119 = scmp.eq.s32.totalorder %s13, 1
    %p120 = scmp.ne.s32.totalorder %s115, %s117
    %p121 = scmp.eq.s32.totalorder %s13, 0
    %p122 = por %p120, %p121
    %p123 = scmp.ne.s32.totalorder %s115, %s117
    %p124 = scmp.eq.s32.totalorder %s18, 1
    %p125 = por %p123, %p124
    %p126 = scmp.ne.s32.totalorder %s117, %s118
    %p127 = scmp.eq.s32.totalorder %s18, 0
    %p128 = por %p126, %p127
    %p129 = scmp.ne.s32.totalorder %s117, %s118
    %p130 = scmp.eq.s32.totalorder %s19, 1
    %p131 = por %p129, %p130
    %p133 = scmp.ne.s32.totalorder %s118, %s132
    %p134 = scmp.eq.s32.totalorder %s19, 0
    %p135 = por %p133, %p134
    %s137 = sadd.s32 %s136, 1
    %p140 = scmp.eq.s32.totalorder %s13, 1
    %p141 = scmp.ne.s32.totalorder %s136, %s138
    %p142 = scmp.eq.s32.totalorder %s13, 0
    %p143 = por %p141, %p142
    %p144 = scmp.ne.s32.totalorder %s136, %s138
    %p145 = scmp.eq.s32.totalorder %s18, 1
    %p146 = por %p144, %p145
    %p147 = scmp.ne.s32.totalorder %s138, %s139
    %p148 = scmp.eq.s32.totalorder %s18, 0
    %p149 = por %p147, %p148
    %p150 = scmp.ne.s32.totalorder %s138, %s139
    %p151 = scmp.eq.s32.totalorder %s19, 1
    %p152 = por %p150, %p151
    %p154 = scmp.ne.s32.totalorder %s139, %s153
    %p155 = scmp.eq.s32.totalorder %s19, 0
    %p156 = por %p154, %p155
    %s158 = sadd.s32 %s157, 1
    %p161 = scmp.eq.s32.totalorder %s13, 1
    %p162 = scmp.ne.s32.totalorder %s157, %s159
    %p163 = scmp.eq.s32.totalorder %s13, 0
    %p164 = por %p162, %p163
    %p165 = scmp.ne.s32.totalorder %s157, %s159
    %p166 = scmp.eq.s32.totalorder %s18, 1
    %p167 = por %p165, %p166
    %p168 = scmp.ne.s32.totalorder %s159, %s160
    %p169 = scmp.eq.s32.totalorder %s18, 0
    %p170 = por %p168, %p169
    %p171 = scmp.ne.s32.totalorder %s159, %s160
    %p172 = scmp.eq.s32.totalorder %s19, 1
    %p173 = por %p171, %p172
    %p175 = scmp.ne.s32.totalorder %s160, %s174
    %p176 = scmp.eq.s32.totalorder %s19, 0
    %p177 = por %p175, %p176
    %s178 = ssub.s32 %s13, %s20
    %p179 = scmp.eq.s32.totalorder %s178, 0
    %s181 = sadd.s32 %s180, 1
    %s182 = scalar_select %p179, %s180, %s181
    %p185 = pneg %p179
    %p186 = scmp.eq.s32.totalorder %s13, 1
    %p187 = por %p185, %p186
    %p188 = scmp.ne.s32.totalorder %s180, %s183
    %p189 = scmp.eq.s32.totalorder %s13, 0
    %p190 = por %p188, %p189
    %p191 = scmp.ne.s32.totalorder %s180, %s183
    %p192 = scmp.eq.s32.totalorder %s18, 1
    %p193 = por %p191, %p192
    %p194 = scmp.ne.s32.totalorder %s183, %s184
    %p195 = scmp.eq.s32.totalorder %s18, 0
    %p196 = por %p194, %p195
    %p197 = scmp.ne.s32.totalorder %s183, %s184
    %p198 = scmp.eq.s32.totalorder %s19, 1
    %p199 = por %p197, %p198
    %p201 = scmp.ne.s32.totalorder %s184, %s200
    %p202 = scmp.eq.s32.totalorder %s19, 0
    %p203 = por %p201, %p202
    %p204 = scmp.le.s32.totalorder 1, %s13
    %p205 = scmp.lt.s32.totalorder %s13, 3
    %p206 = pnand %p204, %p205
    %p207 = pneg %p206
    // Predicated region
    $region9: #{last_octave_conv_pallas.1} parent=5 // pred_check
      _
    $region10: #{last_octave_conv_pallas.1} parent=5 // pred_check_branch
      %209 = sbr.rel (%p206) target = $region12
    $region11: #{last_octave_conv_pallas.1} parent=5 // pred_region
      %s210 = ssub.s32 %s13, 1
      // Predicated region
      $region13: #{last_octave_conv_pallas.1} parent=11 // pred_check
        %p211 = pneg %p86
      $region14: #{last_octave_conv_pallas.1} parent=11 // pred_check_branch
        %213 = sbr.rel (%p211) target = $region16
      $region15: #{last_octave_conv_pallas.1} parent=11 // pred_region
        _
      $region16: #{last_octave_conv_pallas.1} parent=11 // pred_fallthru
        _
      // Predicated region
      $region17: #{last_octave_conv_pallas.1} parent=11 // pred_check
        %p214 = pneg %p107
      $region18: #{last_octave_conv_pallas.1} parent=11 // pred_check_branch
        %216 = sbr.rel (%p214) target = $region20
      $region19: #{last_octave_conv_pallas.1} parent=11 // pred_region
        _
      $region20: #{last_octave_conv_pallas.1} parent=11 // pred_fallthru
        _
      // Predicated region
      $region21: #{last_octave_conv_pallas.1} parent=11 // pred_check
        %p217 = pneg %p128
      $region22: #{last_octave_conv_pallas.1} parent=11 // pred_check_branch
        %219 = sbr.rel (%p217) target = $region24
      $region23: #{last_octave_conv_pallas.1} parent=11 // pred_region
        _
      $region24: #{last_octave_conv_pallas.1} parent=11 // pred_fallthru
        _
      // Predicated region
      $region25: #{last_octave_conv_pallas.1} parent=11 // pred_check
        %p220 = pneg %p149
      $region26: #{last_octave_conv_pallas.1} parent=11 // pred_check_branch
        %222 = sbr.rel (%p220) target = $region28
      $region27: #{last_octave_conv_pallas.1} parent=11 // pred_region
        _
      $region28: #{last_octave_conv_pallas.1} parent=11 // pred_fallthru
        _
      // Predicated region
      $region29: #{last_octave_conv_pallas.1} parent=11 // pred_check
        %p223 = pneg %p170
      $region30: #{last_octave_conv_pallas.1} parent=11 // pred_check_branch
        %225 = sbr.rel (%p223) target = $region32
      $region31: #{last_octave_conv_pallas.1} parent=11 // pred_region
        _
      $region32: #{last_octave_conv_pallas.1} parent=11 // pred_fallthru
        _
    $region12: #{last_octave_conv_pallas.1} parent=5 // pred_fallthru
      _
    %p226 = scmp.lt.s32.totalorder %s13, 2
    // Predicated region
    $region33: #{last_octave_conv_pallas.1} parent=5 // pred_check
      %p227 = pneg %p226
    $region34: #{last_octave_conv_pallas.1} parent=5 // pred_check_branch
      %229 = sbr.rel (%p227) target = $region36
    $region35: #{last_octave_conv_pallas.1} parent=5 // pred_region
      // Predicated region
      $region37: #{last_octave_conv_pallas.1} parent=35 // pred_check
        %p230 = pneg %p33
      $region38: #{last_octave_conv_pallas.1} parent=35 // pred_check_branch
        %232 = sbr.rel (%p230) target = $region40
      $region39: #{last_octave_conv_pallas.1} parent=35 // pred_region
        %s233 = smul.u32 2, %s13
        %p234 = scmp.lt.s32.totalorder %s233, 3
        %s235 = scalar_select %p234, %s233, 3
        %s236 = smul.addr %s235, 4
        %s237 = smul.addr %s236, 4
        %s238 = scalar_lea.vmem %s0, %s237
        %s239 = smul.u32 2, %s13
      $region40: #{last_octave_conv_pallas.1} parent=35 // pred_fallthru
        _
      // Predicated region
      $region41: #{last_octave_conv_pallas.1} parent=35 // pred_check
        %p240 = pneg %p59
      $region42: #{last_octave_conv_pallas.1} parent=35 // pred_check_branch
        %242 = sbr.rel (%p240) target = $region44
      $region43: #{last_octave_conv_pallas.1} parent=35 // pred_region
        %s243 = smul.u32 2, %s13
        %p244 = scmp.lt.s32.totalorder %s243, 3
        %s245 = scalar_select %p244, %s243, 3
        %s246 = smul.addr %s245, 2
        %s247 = smul.addr %s246, 4
        %s248 = scalar_lea.vmem %s1, %s247
        %s249 = smul.u32 2, %s13
      $region44: #{last_octave_conv_pallas.1} parent=35 // pred_fallthru
        _
    $region36: #{last_octave_conv_pallas.1} parent=5 // pred_fallthru
      _
    %p250 = scmp.le.s32.totalorder 1, %s13
    %p251 = scmp.lt.s32.totalorder %s13, 3
    %p252 = pnand %p250, %p251
    %p253 = pneg %p252
    // Predicated region
    $region45: #{last_octave_conv_pallas.1} parent=5 // pred_check
      _
    $region46: #{last_octave_conv_pallas.1} parent=5 // pred_check_branch
      %255 = sbr.rel (%p252) target = $region48
    $region47: #{last_octave_conv_pallas.1} parent=5 // pred_region
      %s256 = ssub.s32 %s13, 1
      %s257 = smul.u32 2, %s18
      %p258 = scmp.lt.s32.totalorder %s257, 3
      %s259 = scalar_select %p258, %s257, 3
      %s260 = smul.addr %s259, 4
      %s261 = smul.addr %s260, 4
      %s262 = scalar_lea.vmem %s0, %s261
      %p263 = pneg %p39
      %p264 = pneg %p36
      %s265 = smul.u32 2, %s18
      %p266 = scmp.lt.s32.totalorder %s265, 3
      %s267 = scalar_select %p266, %s265, 3
      %s268 = smul.addr %s267, 2
      %s269 = smul.addr %s268, 4
      %s270 = scalar_lea.vmem %s1, %s269
      %p271 = pneg %p65
      %p272 = pneg %p62
      %p273 = pneg %p86
      %p274 = pneg %p83
      %p275 = pneg %p107
      %p276 = pneg %p104
      %p277 = pneg %p128
      %p278 = pneg %p125
      %p279 = pneg %p149
      %p280 = pneg %p146
      %p281 = pneg %p170
      %p282 = pneg %p167
      %p283 = pneg %p196
      %p284 = pneg %p193
      %s285 = smul.u32 2, %s18
      %p286 = scmp.lt.s32.totalorder %s285, 3
      %s287 = scalar_select %p286, %s285, 3
      %s288 = smul.addr %s287, 2
      %s289 = smul.addr %s288, 8
      %s290 = scalar_lea.vmem %s7, %s289
      %s291 = smul.u32 2, %s18
      %p292 = scmp.lt.s32.totalorder %s291, 3
      %s293 = scalar_select %p292, %s291, 3
      %s294 = smul.addr %s293, 4
      %s295 = smul.addr %s294, 4
      %s296 = scalar_lea.vmem %s0, %s295
      %s297 = smul.u32 2, %s18
      %s298 = smul.u32 2, %s18
      %p299 = scmp.lt.s32.totalorder %s298, 3
      %s300 = scalar_select %p299, %s298, 3
      %s301 = smul.addr %s300, 2
      %s302 = smul.addr %s301, 4
      %s303 = scalar_lea.vmem %s1, %s302
      %s304 = smul.u32 2, %s18
      %s305 = smul.u32 2, %s18
      %p306 = scmp.lt.s32.totalorder %s305, 3
      %s307 = scalar_select %p306, %s305, 3
      %s308 = smul.addr %s307, 2
      %s309 = smul.addr %s308, 8
      %s310 = scalar_lea.vmem %s7, %s309
      %s311 = smul.u32 2, %s18
      %313 = vst [vmem:[#allocation2] sm:$0xf] 0
      %314 = vst [vmem:[#allocation2 + $0x10] sm:$0xf] 0
      %315 = vst [vmem:[#allocation2 + $0x20] sm:$0xf] 0
      %316 = vst [vmem:[#allocation2 + $0x30] sm:$0xf] 0
      %317 = vst [vmem:[#allocation2 + $0xc] sm:$0xf] 0
      %318 = vst [vmem:[#allocation2 + $0x1c] sm:$0xf] 0
      %319 = vst [vmem:[#allocation2 + $0x2c] sm:$0xf] 0
      %320 = vst [vmem:[#allocation2 + $0x3c] sm:$0xf] 0
      %v321 = vld [vmem:[%s4] sm:$0x3]
      %v322 = vld [vmem:[%s296] sm:$0xff]
      %v323 = vld [vmem:[%s296 + $0x8] sm:$0xff]
      %324 = vst [vmem:[#allocation2 + $0x4] sm:$0xff] %v322
      %325 = vst [vmem:[#allocation2 + $0x14] sm:$0xff] %v323
      %v326 = vld [vmem:[#allocation2] sm:$0xff]
      %v327 = vld [vmem:[#allocation2 + $0x8] sm:$0xf]
      %v328 = vld [vmem:[#allocation2 + $0x10] sm:$0xff]
      %v329 = vld [vmem:[#allocation2 + $0x18] sm:$0xf]
      %v332 = vunpack.c.l.s4 1966171168
      %v333 = vunpack.c.0.s8 %v332
      %v334 = vlaneseq
      %v335 = vshrl.u32 %v334, 7
      %v336 = vsub.s32 %v333, %v335
      %v337 = vrot.slane %v321, %v336
      %v338 = vcombine.high %v337, %v337
      %v340 = vunpack.c.l.s4 1966171168
      %v341 = vunpack.c.0.s8 %v340
      %v342 = vlaneseq
      %v343 = vshrl.u32 %v342, 7
      %v344 = vsub.s32 %v341, %v343
      %v345 = vrot.slane %v337, %v344
      %v347 = vunpack.c.l.s4 1966171168
      %v348 = vunpack.c.0.s8 %v347
      %v349 = vlaneseq
      %v350 = vshrl.u32 %v349, 7
      %v351 = vsub.s32 %v348, %v350
      %v352 = vrot.slane %v338, %v351
      %v354 = vpack.i.b16 %v345, %v345
      %v356 = vlaneseq
      %v357 = vshrl.u32 %v356, 7
      %v358 = vsub.s32 0, %v357
      %v359 = vrot.slane %v354, %v358
      %v361 = vpack.i.b16 %v352, %v352
      %v363 = vlaneseq
      %v364 = vshrl.u32 %v363, 7
      %v365 = vsub.s32 0, %v364
      %v366 = vrot.slane %v361, %v365
      %v369 = vunpack.c.l.b16 %v359
      %v370 = vunpack.c.l.b16 %v366
      %v371 = vpack.c.b16 %v370, %v369
      %372 = vrot.lane.b32.xlu0 %v371, 111
      %v373 = vpop.permute.xlu0 %372
      %v374 = vrot.slane %v373, 4
      %vm375 = vcmask 908288
      %v376 = vsel %vm375, %v374, %v373
      %v379 = vmul.bf16 %v326, %v376
      %v380 = vmul.bf16 %v327, %v374
      %v381 = vmul.bf16 %v328, %v376
      %v382 = vmul.bf16 %v329, %v374
      %387 = vrot.lane.b32.xlu0 %v379, 17
      %v388 = vpop.permute.xlu0 %387
      %389 = vrot.lane.b32.xlu0 %v380, 17
      %v390 = vpop.permute.xlu0 %389
      %391 = vrot.lane.b32.xlu0 %v381, 17
      %v392 = vpop.permute.xlu0 %391
      %393 = vrot.lane.b32.xlu0 %v382, 17
      %v394 = vpop.permute.xlu0 %393
      %v395 = vrot.slane %v388, 4
      %v396 = vrot.slane %v390, 4
      %v397 = vrot.slane %v392, 4
      %v398 = vrot.slane %v394, 4
      %vm399 = vcmask 1043456
      %v400 = vsel %vm399, %v395, %v396
      %vm401 = vcmask 138240
      %v402 = vsel %vm401, %v388, %v400
      %v403 = vsel %vm399, %v397, %v398
      %v404 = vsel %vm401, %v392, %v403
      %407 = vst [vmem:[#allocation4] sm:$0xff] %v402
      %408 = vst [vmem:[#allocation4 + $0x10] sm:$0xff] %v404
      %v409 = vld [vmem:[#allocation2] sm:$0xff]
      %v410 = vld [vmem:[#allocation2 + $0x8] sm:$0xf]
      %v411 = vld [vmem:[#allocation2 + $0x10] sm:$0xff]
      %v412 = vld [vmem:[#allocation2 + $0x18] sm:$0xf]
      %417 = vrot.lane.b32.xlu0 %v409, 16
      %v418 = vpop.permute.xlu0 %417
      %419 = vrot.lane.b32.xlu0 %v410, 16
      %v420 = vpop.permute.xlu0 %419
      %421 = vrot.lane.b32.xlu0 %v411, 16
      %v422 = vpop.permute.xlu0 %421
      %423 = vrot.lane.b32.xlu0 %v412, 16
      %v424 = vpop.permute.xlu0 %423
      %v425 = vrot.slane %v418, 4
      %v426 = vrot.slane %v420, 4
      %v427 = vrot.slane %v422, 4
      %v428 = vrot.slane %v424, 4
      %v429 = vsel %vm399, %v425, %v426
      %vm430 = vcmask 130048
      %v431 = vsel %vm430, %v418, %v429
      %v432 = vsel %vm399, %v427, %v428
      %v433 = vsel %vm430, %v422, %v432
      %436 = vst [vmem:[#allocation4 + $0x20] sm:$0xff] %v431
      %437 = vst [vmem:[#allocation4 + $0x30] sm:$0xff] %v433
      %v438 = vld [vmem:[#allocation2] sm:$0xff]
      %v439 = vld [vmem:[#allocation2 + $0x8] sm:$0xf]
      %v440 = vld [vmem:[#allocation2 + $0x10] sm:$0xff]
      %v441 = vld [vmem:[#allocation2 + $0x18] sm:$0xf]
      %v442 = vshrl.u32 %v345, 16
      %v443 = vpack.i.b16 %v442, %v442
      %v445 = vlaneseq
      %v446 = vshrl.u32 %v445, 7
      %v447 = vsub.s32 0, %v446
      %v448 = vrot.slane %v443, %v447
      %v449 = vshrl.u32 %v352, 16
      %v450 = vpack.i.b16 %v449, %v449
      %v452 = vlaneseq
      %v453 = vshrl.u32 %v452, 7
      %v454 = vsub.s32 0, %v453
      %v455 = vrot.slane %v450, %v454
      %v458 = vunpack.c.l.b16 %v448
      %v459 = vunpack.c.l.b16 %v455
      %v460 = vpack.c.b16 %v459, %v458
      %461 = vrot.lane.b32.xlu0 %v460, 113
      %v462 = vpop.permute.xlu0 %461
      %v463 = vrot.slane %v462, 4
      %vm464 = vcmask 924672
      %v465 = vsel %vm464, %v463, %v462
      %v468 = vmul.bf16 %v438, %v465
      %v469 = vmul.bf16 %v439, %v463
      %v470 = vmul.bf16 %v440, %v465
      %v471 = vmul.bf16 %v441, %v463
      %476 = vrot.lane.b32.xlu0 %v468, 15
      %v477 = vpop.permute.xlu0 %476
      %478 = vrot.lane.b32.xlu0 %v469, 15
      %v479 = vpop.permute.xlu0 %478
      %480 = vrot.lane.b32.xlu0 %v470, 15
      %v481 = vpop.permute.xlu0 %480
      %482 = vrot.lane.b32.xlu0 %v471, 15
      %v483 = vpop.permute.xlu0 %482
      %v484 = vrot.slane %v477, 4
      %v485 = vrot.slane %v479, 4
      %v486 = vrot.slane %v481, 4
      %v487 = vrot.slane %v483, 4
      %v488 = vsel %vm399, %v484, %v485
      %vm489 = vcmask 121856
      %v490 = vsel %vm489, %v477, %v488
      %v491 = vsel %vm399, %v486, %v487
      %v492 = vsel %vm489, %v481, %v491
      %495 = vst [vmem:[#allocation4 + $0x40] sm:$0xff] %v490
      %496 = vst [vmem:[#allocation4 + $0x50] sm:$0xff] %v492
      %v497 = vld [vmem:[#allocation2] sm:$0xff]
      %v498 = vld [vmem:[#allocation2 + $0x8] sm:$0xf]
      %v499 = vld [vmem:[#allocation2 + $0x10] sm:$0xff]
      %v500 = vld [vmem:[#allocation2 + $0x18] sm:$0xf]
      %501 = vrot.lane.b32.xlu0 %v371, 127
      %v502 = vpop.permute.xlu0 %501
      %v503 = vrot.slane %v502, 4
      %vm504 = vcmask 1039360
      %v505 = vsel %vm504, %v503, %v502
      %v508 = vmul.bf16 %v497, %v505
      %v509 = vmul.bf16 %v498, %v503
      %v510 = vmul.bf16 %v499, %v505
      %v511 = vmul.bf16 %v500, %v503
      %516 = vrot.lane.b32.xlu0 %v508, 1
      %v517 = vpop.permute.xlu0 %516
      %518 = vrot.lane.b32.xlu0 %v509, 1
      %v519 = vpop.permute.xlu0 %518
      %520 = vrot.lane.b32.xlu0 %v510, 1
      %v521 = vpop.permute.xlu0 %520
      %522 = vrot.lane.b32.xlu0 %v511, 1
      %v523 = vpop.permute.xlu0 %522
      %v524 = vrot.slane %v517, 4
      %v525 = vrot.slane %v519, 4
      %v526 = vrot.slane %v521, 4
      %v527 = vrot.slane %v523, 4
      %v528 = vsel %vm399, %v524, %v525
      %vm529 = vcmask 7168
      %v530 = vsel %vm529, %v517, %v528
      %v531 = vsel %vm399, %v526, %v527
      %v532 = vsel %vm529, %v521, %v531
      %535 = vst [vmem:[#allocation4 + $0x60] sm:$0xff] %v530
      %536 = vst [vmem:[#allocation4 + $0x70] sm:$0xff] %v532
      %v537 = vld [vmem:[#allocation2 + $0x4] sm:$0xff]
      %v538 = vld [vmem:[#allocation2 + $0x14] sm:$0xff]
      %539 = vst [vmem:[#allocation4 + $0x80] sm:$0xff] %v537
      %540 = vst [vmem:[#allocation4 + $0x90] sm:$0xff] %v538
      %v541 = vld [vmem:[#allocation2 + $0x4] sm:$0xff]
      %v542 = vld [vmem:[#allocation2 + $0xc] sm:$0xf]
      %v543 = vld [vmem:[#allocation2 + $0x14] sm:$0xff]
      %v544 = vld [vmem:[#allocation2 + $0x1c] sm:$0xf]
      %545 = vrot.lane.b32.xlu0 %v460, 1
      %v546 = vpop.permute.xlu0 %545
      %v547 = vrot.slane %v546, 4
      %v548 = vsel %vm529, %v547, %v546
      %v551 = vmul.bf16 %v541, %v548
      %v552 = vmul.bf16 %v542, %v547
      %v553 = vmul.bf16 %v543, %v548
      %v554 = vmul.bf16 %v544, %v547
      %559 = vrot.lane.b32.xlu0 %v551, 127
      %v560 = vpop.permute.xlu0 %559
      %561 = vrot.lane.b32.xlu0 %v552, 127
      %v562 = vpop.permute.xlu0 %561
      %563 = vrot.lane.b32.xlu0 %v553, 127
      %v564 = vpop.permute.xlu0 %563
      %565 = vrot.lane.b32.xlu0 %v554, 127
      %v566 = vpop.permute.xlu0 %565
      %v567 = vrot.slane %v560, 4
      %v568 = vrot.slane %v562, 4
      %v569 = vrot.slane %v564, 4
      %v570 = vrot.slane %v566, 4
      %v571 = vsel %vm399, %v567, %v568
      %v572 = vsel %vm504, %v560, %v571
      %v573 = vsel %vm399, %v569, %v570
      %v574 = vsel %vm504, %v564, %v573
      %577 = vst [vmem:[#allocation4 + $0xa0] sm:$0xff] %v572
      %578 = vst [vmem:[#allocation4 + $0xb0] sm:$0xff] %v574
      %v579 = vld [vmem:[#allocation2 + $0x4] sm:$0xff]
      %v580 = vld [vmem:[#allocation2 + $0xc] sm:$0xf]
      %v581 = vld [vmem:[#allocation2 + $0x14] sm:$0xff]
      %v582 = vld [vmem:[#allocation2 + $0x1c] sm:$0xf]
      %583 = vrot.lane.b32.xlu0 %v371, 15
      %v584 = vpop.permute.xlu0 %583
      %v585 = vrot.slane %v584, 4
      %v586 = vsel %vm489, %v585, %v584
      %v589 = vmul.bf16 %v579, %v586
      %v590 = vmul.bf16 %v580, %v585
      %v591 = vmul.bf16 %v581, %v586
      %v592 = vmul.bf16 %v582, %v585
      %597 = vrot.lane.b32.xlu0 %v589, 113
      %v598 = vpop.permute.xlu0 %597
      %599 = vrot.lane.b32.xlu0 %v590, 113
      %v600 = vpop.permute.xlu0 %599
      %601 = vrot.lane.b32.xlu0 %v591, 113
      %v602 = vpop.permute.xlu0 %601
      %603 = vrot.lane.b32.xlu0 %v592, 113
      %v604 = vpop.permute.xlu0 %603
      %v605 = vrot.slane %v598, 4
      %v606 = vrot.slane %v600, 4
      %v607 = vrot.slane %v602, 4
      %v608 = vrot.slane %v604, 4
      %v609 = vsel %vm399, %v605, %v606
      %v610 = vsel %vm464, %v598, %v609
      %v611 = vsel %vm399, %v607, %v608
      %v612 = vsel %vm464, %v602, %v611
      %615 = vst [vmem:[#allocation4 + $0xc0] sm:$0xff] %v610
      %616 = vst [vmem:[#allocation4 + $0xd0] sm:$0xff] %v612
      %v617 = vld [vmem:[#allocation2 + $0x4] sm:$0xff]
      %v618 = vld [vmem:[#allocation2 + $0xc] sm:$0xf]
      %v619 = vld [vmem:[#allocation2 + $0x14] sm:$0xff]
      %v620 = vld [vmem:[#allocation2 + $0x1c] sm:$0xf]
      %625 = vrot.lane.b32.xlu0 %v617, 112
      %v626 = vpop.permute.xlu0 %625
      %627 = vrot.lane.b32.xlu0 %v618, 112
      %v628 = vpop.permute.xlu0 %627
      %629 = vrot.lane.b32.xlu0 %v619, 112
      %v630 = vpop.permute.xlu0 %629
      %631 = vrot.lane.b32.xlu0 %v620, 112
      %v632 = vpop.permute.xlu0 %631
      %v633 = vrot.slane %v626, 4
      %v634 = vrot.slane %v628, 4
      %v635 = vrot.slane %v630, 4
      %v636 = vrot.slane %v632, 4
      %v637 = vsel %vm399, %v633, %v634
      %vm638 = vcmask 916480
      %v639 = vsel %vm638, %v626, %v637
      %v640 = vsel %vm399, %v635, %v636
      %v641 = vsel %vm638, %v630, %v640
      %644 = vst [vmem:[#allocation4 + $0xe0] sm:$0xff] %v639
      %645 = vst [vmem:[#allocation4 + $0xf0] sm:$0xff] %v641
      %v646 = vld [vmem:[#allocation2 + $0x4] sm:$0xff]
      %v647 = vld [vmem:[#allocation2 + $0xc] sm:$0xf]
      %v648 = vld [vmem:[#allocation2 + $0x14] sm:$0xff]
      %v649 = vld [vmem:[#allocation2 + $0x1c] sm:$0xf]
      %650 = vrot.lane.b32.xlu0 %v460, 17
      %v651 = vpop.permute.xlu0 %650
      %v652 = vrot.slane %v651, 4
      %v653 = vsel %vm401, %v652, %v651
      %v656 = vmul.bf16 %v646, %v653
      %v657 = vmul.bf16 %v647, %v652
      %v658 = vmul.bf16 %v648, %v653
      %v659 = vmul.bf16 %v649, %v652
      %664 = vrot.lane.b32.xlu0 %v656, 111
      %v665 = vpop.permute.xlu0 %664
      %666 = vrot.lane.b32.xlu0 %v657, 111
      %v667 = vpop.permute.xlu0 %666
      %668 = vrot.lane.b32.xlu0 %v658, 111
      %v669 = vpop.permute.xlu0 %668
      %670 = vrot.lane.b32.xlu0 %v659, 111
      %v671 = vpop.permute.xlu0 %670
      %v672 = vrot.slane %v665, 4
      %v673 = vrot.slane %v667, 4
      %v674 = vrot.slane %v669, 4
      %v675 = vrot.slane %v671, 4
      %v676 = vsel %vm399, %v672, %v673
      %v677 = vsel %vm375, %v665, %v676
      %v678 = vsel %vm399, %v674, %v675
      %v679 = vsel %vm375, %v669, %v678
      %682 = vst [vmem:[#allocation4 + $0x100] sm:$0xff] %v677
      %683 = vst [vmem:[#allocation4 + $0x110] sm:$0xff] %v679
      %s684 = scalar_lea.vmem %s296, 16
      %v685 = vld [vmem:[%s684] sm:$0xff]
      %v686 = vld [vmem:[%s684 + $0x8] sm:$0xff]
      %s687 = scalar_lea.vmem [#allocation2], 32
      %688 = vst [vmem:[%s687 + $0x4] sm:$0xff] %v685
      %689 = vst [vmem:[%s687 + $0x14] sm:$0xff] %v686
      %v690 = vld [vmem:[%s687] sm:$0xff]
      %v691 = vld [vmem:[%s687 + $0x8] sm:$0xf]
      %v692 = vld [vmem:[%s687 + $0x10] sm:$0xff]
      %v693 = vld [vmem:[%s687 + $0x18] sm:$0xf]
      %v694 = vmul.bf16 %v690, %v376
      %v695 = vmul.bf16 %v691, %v374
      %v696 = vmul.bf16 %v692, %v376
      %v697 = vmul.bf16 %v693, %v374
      %702 = vrot.lane.b32.xlu0 %v694, 17
      %v703 = vpop.permute.xlu0 %702
      %704 = vrot.lane.b32.xlu0 %v695, 17
      %v705 = vpop.permute.xlu0 %704
      %706 = vrot.lane.b32.xlu0 %v696, 17
      %v707 = vpop.permute.xlu0 %706
      %708 = vrot.lane.b32.xlu0 %v697, 17
      %v709 = vpop.permute.xlu0 %708
      %v710 = vrot.slane %v703, 4
      %v711 = vrot.slane %v705, 4
      %v712 = vrot.slane %v707, 4
      %v713 = vrot.slane %v709, 4
      %v714 = vsel %vm399, %v710, %v711
      %v715 = vsel %vm401, %v703, %v714
      %v716 = vsel %vm399, %v712, %v713
      %v717 = vsel %vm401, %v707, %v716
      %720 = vst [vmem:[#allocation4 + $0x8] sm:$0xff] %v715
      %721 = vst [vmem:[#allocation4 + $0x18] sm:$0xff] %v717
      %v722 = vld [vmem:[%s687] sm:$0xff]
      %v723 = vld [vmem:[%s687 + $0x8] sm:$0xf]
      %v724 = vld [vmem:[%s687 + $0x10] sm:$0xff]
      %v725 = vld [vmem:[%s687 + $0x18] sm:$0xf]
      %730 = vrot.lane.b32.xlu0 %v722, 16
      %v731 = vpop.permute.xlu0 %730
      %732 = vrot.lane.b32.xlu0 %v723, 16
      %v733 = vpop.permute.xlu0 %732
      %734 = vrot.lane.b32.xlu0 %v724, 16
      %v735 = vpop.permute.xlu0 %734
      %736 = vrot.lane.b32.xlu0 %v725, 16
      %v737 = vpop.permute.xlu0 %736
      %v738 = vrot.slane %v731, 4
      %v739 = vrot.slane %v733, 4
      %v740 = vrot.slane %v735, 4
      %v741 = vrot.slane %v737, 4
      %v742 = vsel %vm399, %v738, %v739
      %v743 = vsel %vm430, %v731, %v742
      %v744 = vsel %vm399, %v740, %v741
      %v745 = vsel %vm430, %v735, %v744
      %748 = vst [vmem:[#allocation4 + $0x28] sm:$0xff] %v743
      %749 = vst [vmem:[#allocation4 + $0x38] sm:$0xff] %v745
      %v750 = vld [vmem:[%s687] sm:$0xff]
      %v751 = vld [vmem:[%s687 + $0x8] sm:$0xf]
      %v752 = vld [vmem:[%s687 + $0x10] sm:$0xff]
      %v753 = vld [vmem:[%s687 + $0x18] sm:$0xf]
      %v754 = vmul.bf16 %v750, %v465
      %v755 = vmul.bf16 %v751, %v463
      %v756 = vmul.bf16 %v752, %v465
      %v757 = vmul.bf16 %v753, %v463
      %762 = vrot.lane.b32.xlu0 %v754, 15
      %v763 = vpop.permute.xlu0 %762
      %764 = vrot.lane.b32.xlu0 %v755, 15
      %v765 = vpop.permute.xlu0 %764
      %766 = vrot.lane.b32.xlu0 %v756, 15
      %v767 = vpop.permute.xlu0 %766
      %768 = vrot.lane.b32.xlu0 %v757, 15
      %v769 = vpop.permute.xlu0 %768
      %v770 = vrot.slane %v763, 4
      %v771 = vrot.slane %v765, 4
      %v772 = vrot.slane %v767, 4
      %v773 = vrot.slane %v769, 4
      %v774 = vsel %vm399, %v770, %v771
      %v775 = vsel %vm489, %v763, %v774
      %v776 = vsel %vm399, %v772, %v773
      %v777 = vsel %vm489, %v767, %v776
      %780 = vst [vmem:[#allocation4 + $0x48] sm:$0xff] %v775
      %781 = vst [vmem:[#allocation4 + $0x58] sm:$0xff] %v777
      %v782 = vld [vmem:[%s687] sm:$0xff]
      %v783 = vld [vmem:[%s687 + $0x8] sm:$0xf]
      %v784 = vld [vmem:[%s687 + $0x10] sm:$0xff]
      %v785 = vld [vmem:[%s687 + $0x18] sm:$0xf]
      %v786 = vmul.bf16 %v782, %v505
      %v787 = vmul.bf16 %v783, %v503
      %v788 = vmul.bf16 %v784, %v505
      %v789 = vmul.bf16 %v785, %v503
      %794 = vrot.lane.b32.xlu0 %v786, 1
      %v795 = vpop.permute.xlu0 %794
      %796 = vrot.lane.b32.xlu0 %v787, 1
      %v797 = vpop.permute.xlu0 %796
      %798 = vrot.lane.b32.xlu0 %v788, 1
      %v799 = vpop.permute.xlu0 %798
      %800 = vrot.lane.b32.xlu0 %v789, 1
      %v801 = vpop.permute.xlu0 %800
      %v802 = vrot.slane %v795, 4
      %v803 = vrot.slane %v797, 4
      %v804 = vrot.slane %v799, 4
      %v805 = vrot.slane %v801, 4
      %v806 = vsel %vm399, %v802, %v803
      %v807 = vsel %vm529, %v795, %v806
      %v808 = vsel %vm399, %v804, %v805
      %v809 = vsel %vm529, %v799, %v808
      %812 = vst [vmem:[#allocation4 + $0x68] sm:$0xff] %v807
      %813 = vst [vmem:[#allocation4 + $0x78] sm:$0xff] %v809
      %v814 = vld [vmem:[%s687 + $0x4] sm:$0xff]
      %v815 = vld [vmem:[%s687 + $0x14] sm:$0xff]
      %816 = vst [vmem:[#allocation4 + $0x88] sm:$0xff] %v814
      %817 = vst [vmem:[#allocation4 + $0x98] sm:$0xff] %v815
      %v818 = vld [vmem:[%s687 + $0x4] sm:$0xff]
      %v819 = vld [vmem:[%s687 + $0xc] sm:$0xf]
      %v820 = vld [vmem:[%s687 + $0x14] sm:$0xff]
      %v821 = vld [vmem:[%s687 + $0x1c] sm:$0xf]
      %v822 = vmul.bf16 %v818, %v548
      %v823 = vmul.bf16 %v819, %v547
      %v824 = vmul.bf16 %v820, %v548
      %v825 = vmul.bf16 %v821, %v547
      %830 = vrot.lane.b32.xlu0 %v822, 127
      %v831 = vpop.permute.xlu0 %830
      %832 = vrot.lane.b32.xlu0 %v823, 127
      %v833 = vpop.permute.xlu0 %832
      %834 = vrot.lane.b32.xlu0 %v824, 127
      %v835 = vpop.permute.xlu0 %834
      %836 = vrot.lane.b32.xlu0 %v825, 127
      %v837 = vpop.permute.xlu0 %836
      %v838 = vrot.slane %v831, 4
      %v839 = vrot.slane %v833, 4
      %v840 = vrot.slane %v835, 4
      %v841 = vrot.slane %v837, 4
      %v842 = vsel %vm399, %v838, %v839
      %v843 = vsel %vm504, %v831, %v842
      %v844 = vsel %vm399, %v840, %v841
      %v845 = vsel %vm504, %v835, %v844
      %848 = vst [vmem:[#allocation4 + $0xa8] sm:$0xff] %v843
      %849 = vst [vmem:[#allocation4 + $0xb8] sm:$0xff] %v845
      %v850 = vld [vmem:[%s687 + $0x4] sm:$0xff]
      %v851 = vld [vmem:[%s687 + $0xc] sm:$0xf]
      %v852 = vld [vmem:[%s687 + $0x14] sm:$0xff]
      %v853 = vld [vmem:[%s687 + $0x1c] sm:$0xf]
      %v854 = vmul.bf16 %v850, %v586
      %v855 = vmul.bf16 %v851, %v585
      %v856 = vmul.bf16 %v852, %v586
      %v857 = vmul.bf16 %v853, %v585
      %862 = vrot.lane.b32.xlu0 %v854, 113
      %v863 = vpop.permute.xlu0 %862
      %864 = vrot.lane.b32.xlu0 %v855, 113
      %v865 = vpop.permute.xlu0 %864
      %866 = vrot.lane.b32.xlu0 %v856, 113
      %v867 = vpop.permute.xlu0 %866
      %868 = vrot.lane.b32.xlu0 %v857, 113
      %v869 = vpop.permute.xlu0 %868
      %v870 = vrot.slane %v863, 4
      %v871 = vrot.slane %v865, 4
      %v872 = vrot.slane %v867, 4
      %v873 = vrot.slane %v869, 4
      %v874 = vsel %vm399, %v870, %v871
      %v875 = vsel %vm464, %v863, %v874
      %v876 = vsel %vm399, %v872, %v873
      %v877 = vsel %vm464, %v867, %v876
      %880 = vst [vmem:[#allocation4 + $0xc8] sm:$0xff] %v875
      %881 = vst [vmem:[#allocation4 + $0xd8] sm:$0xff] %v877
      %v882 = vld [vmem:[%s687 + $0x4] sm:$0xff]
      %v883 = vld [vmem:[%s687 + $0xc] sm:$0xf]
      %v884 = vld [vmem:[%s687 + $0x14] sm:$0xff]
      %v885 = vld [vmem:[%s687 + $0x1c] sm:$0xf]
      %890 = vrot.lane.b32.xlu0 %v882, 112
      %v891 = vpop.permute.xlu0 %890
      %892 = vrot.lane.b32.xlu0 %v883, 112
      %v893 = vpop.permute.xlu0 %892
      %894 = vrot.lane.b32.xlu0 %v884, 112
      %v895 = vpop.permute.xlu0 %894
      %896 = vrot.lane.b32.xlu0 %v885, 112
      %v897 = vpop.permute.xlu0 %896
      %v898 = vrot.slane %v891, 4
      %v899 = vrot.slane %v893, 4
      %v900 = vrot.slane %v895, 4
      %v901 = vrot.slane %v897, 4
      %v902 = vsel %vm399, %v898, %v899
      %v903 = vsel %vm638, %v891, %v902
      %v904 = vsel %vm399, %v900, %v901
      %v905 = vsel %vm638, %v895, %v904
      %908 = vst [vmem:[#allocation4 + $0xe8] sm:$0xff] %v903
      %909 = vst [vmem:[#allocation4 + $0xf8] sm:$0xff] %v905
      %v910 = vld [vmem:[%s687 + $0x4] sm:$0xff]
      %v911 = vld [vmem:[%s687 + $0xc] sm:$0xf]
      %v912 = vld [vmem:[%s687 + $0x14] sm:$0xff]
      %v913 = vld [vmem:[%s687 + $0x1c] sm:$0xf]
      %v914 = vmul.bf16 %v910, %v653
      %v915 = vmul.bf16 %v911, %v652
      %v916 = vmul.bf16 %v912, %v653
      %v917 = vmul.bf16 %v913, %v652
      %922 = vrot.lane.b32.xlu0 %v914, 111
      %v923 = vpop.permute.xlu0 %922
      %924 = vrot.lane.b32.xlu0 %v915, 111
      %v925 = vpop.permute.xlu0 %924
      %926 = vrot.lane.b32.xlu0 %v916, 111
      %v927 = vpop.permute.xlu0 %926
      %928 = vrot.lane.b32.xlu0 %v917, 111
      %v929 = vpop.permute.xlu0 %928
      %v930 = vrot.slane %v923, 4
      %v931 = vrot.slane %v925, 4
      %v932 = vrot.slane %v927, 4
      %v933 = vrot.slane %v929, 4
      %v934 = vsel %vm399, %v930, %v931
      %v935 = vsel %vm375, %v923, %v934
      %v936 = vsel %vm399, %v932, %v933
      %v937 = vsel %vm375, %v927, %v936
      %940 = vst [vmem:[#allocation4 + $0x108] sm:$0xff] %v935
      %941 = vst [vmem:[#allocation4 + $0x118] sm:$0xff] %v937
      %942 = vst [vmem:[#allocation3] sm:$0xf] 0
      %943 = vst [vmem:[#allocation3 + $0x8] sm:$0xf] 0
      %944 = vst [vmem:[#allocation3 + $0x10] sm:$0xf] 0
      %945 = vst [vmem:[#allocation3 + $0x18] sm:$0xf] 0
      %vm946 = vcmask 1043968
      %947 = vst.msk [vmem:[#allocation3 + $0x4] sm:$0xf] %vm946, 0
      %948 = vst.msk [vmem:[#allocation3 + $0xc] sm:$0xf] %vm946, 0
      %949 = vst.msk [vmem:[#allocation3 + $0x14] sm:$0xf] %vm946, 0
      %950 = vst.msk [vmem:[#allocation3 + $0x1c] sm:$0xf] %vm946, 0
      %v951 = vld [vmem:[%s5] sm:$0x1]
      %v952 = vld [vmem:[%s303] sm:$0xf]
      %v953 = vld [vmem:[%s303 + $0x4] sm:$0xf]
      %vm954 = vcmask 519168
      %955 = vst.msk [vmem:[#allocation3 + $0x4] sm:$0xf] %vm954, %v952
      %956 = vst.msk [vmem:[#allocation3 + $0xc] sm:$0xf] %vm954, %v953
      %v957 = vld [vmem:[#allocation3] sm:$0xff]
      %v958 = vld [vmem:[#allocation3 + $0x8] sm:$0xff]
      %v960 = vpack.i.b16 %v951, %v951
      %v962 = vlaneseq
      %v963 = vshrl.u32 %v962, 7
      %v964 = vsub.s32 0, %v963
      %v965 = vrot.slane %v960, %v964
      %v967 = vunpack.c.l.b16 %v965
      %v968 = vpack.c.b16 %v967, %v967
      %969 = vrot.lane.b32.xlu0 %v968, 119
      %v970 = vpop.permute.xlu0 %969
      %v971 = vrot.slane %v970, 4
      %vm972 = vcmask 973824
      %v973 = vsel %vm972, %v971, %v970
      %v975 = vmul.bf16 %v957, %v973
      %v976 = vmul.bf16 %v958, %v973
      %979 = vrot.lane.b32.xlu0 %v975, 9
      %v980 = vpop.permute.xlu0 %979
      %981 = vrot.lane.b32.xlu0 %v976, 9
      %v982 = vpop.permute.xlu0 %981
      %v983 = vrot.slane %v980, 4
      %v984 = vrot.slane %v982, 4
      %vm985 = vcmask 72704
      %v986 = vsel %vm985, %v980, %v983
      %v987 = vsel %vm985, %v982, %v984
      %990 = vst.msk [vmem:[#allocation5] sm:$0xf] %vm954, %v986
      %991 = vst.msk [vmem:[#allocation5 + $0x4] sm:$0xf] %vm954, %v987
      %v992 = vld [vmem:[#allocation3] sm:$0xff]
      %v993 = vld [vmem:[#allocation3 + $0x8] sm:$0xff]
      %996 = vrot.lane.b32.xlu0 %v992, 8
      %v997 = vpop.permute.xlu0 %996
      %998 = vrot.lane.b32.xlu0 %v993, 8
      %v999 = vpop.permute.xlu0 %998
      %v1000 = vrot.slane %v997, 4
      %v1001 = vrot.slane %v999, 4
      %vm1002 = vcmask 64512
      %v1003 = vsel %vm1002, %v997, %v1000
      %v1004 = vsel %vm1002, %v999, %v1001
      %1007 = vst.msk [vmem:[#allocation5 + $0x8] sm:$0xf] %vm954, %v1003
      %1008 = vst.msk [vmem:[#allocation5 + $0xc] sm:$0xf] %vm954, %v1004
      %v1009 = vld [vmem:[#allocation3] sm:$0xff]
      %v1010 = vld [vmem:[#allocation3 + $0x8] sm:$0xff]
      %v1011 = vshrl.u32 %v951, 16
      %v1012 = vpack.i.b16 %v1011, %v1011
      %v1014 = vlaneseq
      %v1015 = vshrl.u32 %v1014, 7
      %v1016 = vsub.s32 0, %v1015
      %v1017 = vrot.slane %v1012, %v1016
      %v1019 = vunpack.c.l.b16 %v1017
      %v1020 = vpack.c.b16 %v1019, %v1019
      %1021 = vrot.lane.b32.xlu0 %v1020, 121
      %v1022 = vpop.permute.xlu0 %1021
      %v1023 = vrot.slane %v1022, 4
      %vm1024 = vcmask 990208
      %v1025 = vsel %vm1024, %v1023, %v1022
      %v1027 = vmul.bf16 %v1009, %v1025
      %v1028 = vmul.bf16 %v1010, %v1025
      %1031 = vrot.lane.b32.xlu0 %v1027, 7
      %v1032 = vpop.permute.xlu0 %1031
      %1033 = vrot.lane.b32.xlu0 %v1028, 7
      %v1034 = vpop.permute.xlu0 %1033
      %v1035 = vrot.slane %v1032, 4
      %v1036 = vrot.slane %v1034, 4
      %vm1037 = vcmask 56320
      %v1038 = vsel %vm1037, %v1032, %v1035
      %v1039 = vsel %vm1037, %v1034, %v1036
      %1042 = vst.msk [vmem:[#allocation5 + $0x10] sm:$0xf] %vm954, %v1038
      %1043 = vst.msk [vmem:[#allocation5 + $0x14] sm:$0xf] %vm954, %v1039
      %v1044 = vld [vmem:[#allocation3] sm:$0xff]
      %v1045 = vld [vmem:[#allocation3 + $0x8] sm:$0xff]
      %1046 = vrot.lane.b32.xlu0 %v968, 127
      %v1047 = vpop.permute.xlu0 %1046
      %v1048 = vrot.slane %v1047, 4
      %v1049 = vsel %vm504, %v1048, %v1047
      %v1051 = vmul.bf16 %v1044, %v1049
      %v1052 = vmul.bf16 %v1045, %v1049
      %1055 = vrot.lane.b32.xlu0 %v1051, 1
      %v1056 = vpop.permute.xlu0 %1055
      %1057 = vrot.lane.b32.xlu0 %v1052, 1
      %v1058 = vpop.permute.xlu0 %1057
      %v1059 = vrot.slane %v1056, 4
      %v1060 = vrot.slane %v1058, 4
      %v1061 = vsel %vm529, %v1056, %v1059
      %v1062 = vsel %vm529, %v1058, %v1060
      %1065 = vst.msk [vmem:[#allocation5 + $0x18] sm:$0xf] %vm954, %v1061
      %1066 = vst.msk [vmem:[#allocation5 + $0x1c] sm:$0xf] %vm954, %v1062
      %v1067 = vld [vmem:[#allocation3 + $0x4] sm:$0xf]
      %v1068 = vld [vmem:[#allocation3 + $0xc] sm:$0xf]
      %1069 = vst.msk [vmem:[#allocation5 + $0x20] sm:$0xf] %vm954, %v1067
      %1070 = vst.msk [vmem:[#allocation5 + $0x24] sm:$0xf] %vm954, %v1068
      %v1071 = vld [vmem:[#allocation3 + $0x4] sm:$0xf]
      %v1072 = vld [vmem:[#allocation3 + $0xc] sm:$0xf]
      %1073 = vrot.lane.b32.xlu0 %v1020, 1
      %v1074 = vpop.permute.xlu0 %1073
      %v1076 = vmul.bf16 %v1071, %v1074
      %v1077 = vmul.bf16 %v1072, %v1074
      %1080 = vrot.lane.b32.xlu0 %v1076, 127
      %v1081 = vpop.permute.xlu0 %1080
      %1082 = vrot.lane.b32.xlu0 %v1077, 127
      %v1083 = vpop.permute.xlu0 %1082
      %1086 = vst.msk [vmem:[#allocation5 + $0x28] sm:$0xf] %vm954, %v1081
      %1087 = vst.msk [vmem:[#allocation5 + $0x2c] sm:$0xf] %vm954, %v1083
      %v1088 = vld [vmem:[#allocation3 + $0x4] sm:$0xf]
      %v1089 = vld [vmem:[#allocation3 + $0xc] sm:$0xf]
      %1090 = vrot.lane.b32.xlu0 %v968, 7
      %v1091 = vpop.permute.xlu0 %1090
      %v1093 = vmul.bf16 %v1088, %v1091
      %v1094 = vmul.bf16 %v1089, %v1091
      %1097 = vrot.lane.b32.xlu0 %v1093, 121
      %v1098 = vpop.permute.xlu0 %1097
      %1099 = vrot.lane.b32.xlu0 %v1094, 121
      %v1100 = vpop.permute.xlu0 %1099
      %1103 = vst.msk [vmem:[#allocation5 + $0x30] sm:$0xf] %vm954, %v1098
      %1104 = vst.msk [vmem:[#allocation5 + $0x34] sm:$0xf] %vm954, %v1100
      %v1105 = vld [vmem:[#allocation3 + $0x4] sm:$0xf]
      %v1106 = vld [vmem:[#allocation3 + $0xc] sm:$0xf]
      %1109 = vrot.lane.b32.xlu0 %v1105, 120
      %v1110 = vpop.permute.xlu0 %1109
      %1111 = vrot.lane.b32.xlu0 %v1106, 120
      %v1112 = vpop.permute.xlu0 %1111
      %1115 = vst.msk [vmem:[#allocation5 + $0x38] sm:$0xf] %vm954, %v1110
      %1116 = vst.msk [vmem:[#allocation5 + $0x3c] sm:$0xf] %vm954, %v1112
      %v1117 = vld [vmem:[#allocation3 + $0x4] sm:$0xf]
      %v1118 = vld [vmem:[#allocation3 + $0xc] sm:$0xf]
      %1119 = vrot.lane.b32.xlu0 %v1020, 9
      %v1120 = vpop.permute.xlu0 %1119
      %v1122 = vmul.bf16 %v1117, %v1120
      %v1123 = vmul.bf16 %v1118, %v1120
      %1126 = vrot.lane.b32.xlu0 %v1122, 119
      %v1127 = vpop.permute.xlu0 %1126
      %1128 = vrot.lane.b32.xlu0 %v1123, 119
      %v1129 = vpop.permute.xlu0 %1128
      %1132 = vst.msk [vmem:[#allocation5 + $0x40] sm:$0xf] %vm954, %v1127
      %1133 = vst.msk [vmem:[#allocation5 + $0x44] sm:$0xf] %vm954, %v1129
      %s1134 = scalar_lea.vmem %s303, 8
      %v1135 = vld [vmem:[%s1134] sm:$0xf]
      %v1136 = vld [vmem:[%s1134 + $0x4] sm:$0xf]
      %s1137 = scalar_lea.vmem [#allocation3], 16
      %1138 = vst.msk [vmem:[%s1137 + $0x4] sm:$0xf] %vm954, %v1135
      %1139 = vst.msk [vmem:[%s1137 + $0xc] sm:$0xf] %vm954, %v1136
      %v1140 = vld [vmem:[%s1137] sm:$0xff]
      %v1141 = vld [vmem:[%s1137 + $0x8] sm:$0xff]
      %v1142 = vmul.bf16 %v1140, %v973
      %v1143 = vmul.bf16 %v1141, %v973
      %1146 = vrot.lane.b32.xlu0 %v1142, 73
      %v1147 = vpop.permute.xlu0 %1146
      %1148 = vrot.lane.b32.xlu0 %v1143, 73
      %v1149 = vpop.permute.xlu0 %1148
      %v1150 = vrot.slane %v1147, 4
      %v1151 = vrot.slane %v1149, 4
      %vm1152 = vcmask 596992
      %v1153 = vsel %vm1152, %v1147, %v1150
      %v1154 = vsel %vm1152, %v1149, %v1151
      %1157 = vst.msk [vmem:[#allocation5] sm:$0xf] %vm946, %v1153
      %1158 = vst.msk [vmem:[#allocation5 + $0x4] sm:$0xf] %vm946, %v1154
      %v1159 = vld [vmem:[%s1137] sm:$0xff]
      %v1160 = vld [vmem:[%s1137 + $0x8] sm:$0xff]
      %1163 = vrot.lane.b32.xlu0 %v1159, 72
      %v1164 = vpop.permute.xlu0 %1163
      %1165 = vrot.lane.b32.xlu0 %v1160, 72
      %v1166 = vpop.permute.xlu0 %1165
      %v1167 = vrot.slane %v1164, 4
      %v1168 = vrot.slane %v1166, 4
      %vm1169 = vcmask 588800
      %v1170 = vsel %vm1169, %v1164, %v1167
      %v1171 = vsel %vm1169, %v1166, %v1168
      %1174 = vst.msk [vmem:[#allocation5 + $0x8] sm:$0xf] %vm946, %v1170
      %1175 = vst.msk [vmem:[#allocation5 + $0xc] sm:$0xf] %vm946, %v1171
      %v1176 = vld [vmem:[%s1137] sm:$0xff]
      %v1177 = vld [vmem:[%s1137 + $0x8] sm:$0xff]
      %v1178 = vmul.bf16 %v1176, %v1025
      %v1179 = vmul.bf16 %v1177, %v1025
      %1182 = vrot.lane.b32.xlu0 %v1178, 71
      %v1183 = vpop.permute.xlu0 %1182
      %1184 = vrot.lane.b32.xlu0 %v1179, 71
      %v1185 = vpop.permute.xlu0 %1184
      %v1186 = vrot.slane %v1183, 4
      %v1187 = vrot.slane %v1185, 4
      %vm1188 = vcmask 580608
      %v1189 = vsel %vm1188, %v1183, %v1186
      %v1190 = vsel %vm1188, %v1185, %v1187
      %1193 = vst.msk [vmem:[#allocation5 + $0x10] sm:$0xf] %vm946, %v1189
      %1194 = vst.msk [vmem:[#allocation5 + $0x14] sm:$0xf] %vm946, %v1190
      %v1195 = vld [vmem:[%s1137] sm:$0xff]
      %v1196 = vld [vmem:[%s1137 + $0x8] sm:$0xff]
      %v1197 = vmul.bf16 %v1195, %v1049
      %v1198 = vmul.bf16 %v1196, %v1049
      %1201 = vrot.lane.b32.xlu0 %v1197, 65
      %v1202 = vpop.permute.xlu0 %1201
      %1203 = vrot.lane.b32.xlu0 %v1198, 65
      %v1204 = vpop.permute.xlu0 %1203
      %v1205 = vrot.slane %v1202, 4
      %v1206 = vrot.slane %v1204, 4
      %vm1207 = vcmask 531456
      %v1208 = vsel %vm1207, %v1202, %v1205
      %v1209 = vsel %vm1207, %v1204, %v1206
      %1212 = vst.msk [vmem:[#allocation5 + $0x18] sm:$0xf] %vm946, %v1208
      %1213 = vst.msk [vmem:[#allocation5 + $0x1c] sm:$0xf] %vm946, %v1209
      %v1214 = vld [vmem:[%s1137 + $0x4] sm:$0xf]
      %v1215 = vld [vmem:[%s1137 + $0xc] sm:$0xf]
      %1218 = vrot.lane.b32.xlu0 %v1214, 64
      %v1219 = vpop.permute.xlu0 %1218
      %1220 = vrot.lane.b32.xlu0 %v1215, 64
      %v1221 = vpop.permute.xlu0 %1220
      %1224 = vst.msk [vmem:[#allocation5 + $0x20] sm:$0xf] %vm946, %v1219
      %1225 = vst.msk [vmem:[#allocation5 + $0x24] sm:$0xf] %vm946, %v1221
      %v1226 = vld [vmem:[%s1137 + $0x4] sm:$0xf]
      %v1227 = vld [vmem:[%s1137 + $0xc] sm:$0xf]
      %v1228 = vmul.bf16 %v1226, %v1074
      %v1229 = vmul.bf16 %v1227, %v1074
      %1232 = vrot.lane.b32.xlu0 %v1228, 63
      %v1233 = vpop.permute.xlu0 %1232
      %1234 = vrot.lane.b32.xlu0 %v1229, 63
      %v1235 = vpop.permute.xlu0 %1234
      %1238 = vst.msk [vmem:[#allocation5 + $0x28] sm:$0xf] %vm946, %v1233
      %1239 = vst.msk [vmem:[#allocation5 + $0x2c] sm:$0xf] %vm946, %v1235
      %v1240 = vld [vmem:[%s1137 + $0x4] sm:$0xf]
      %v1241 = vld [vmem:[%s1137 + $0xc] sm:$0xf]
      %v1242 = vmul.bf16 %v1240, %v1091
      %v1243 = vmul.bf16 %v1241, %v1091
      %1246 = vrot.lane.b32.xlu0 %v1242, 57
      %v1247 = vpop.permute.xlu0 %1246
      %1248 = vrot.lane.b32.xlu0 %v1243, 57
      %v1249 = vpop.permute.xlu0 %1248
      %1252 = vst.msk [vmem:[#allocation5 + $0x30] sm:$0xf] %vm946, %v1247
      %1253 = vst.msk [vmem:[#allocation5 + $0x34] sm:$0xf] %vm946, %v1249
      %v1254 = vld [vmem:[%s1137 + $0x4] sm:$0xf]
      %v1255 = vld [vmem:[%s1137 + $0xc] sm:$0xf]
      %1258 = vrot.lane.b32.xlu0 %v1254, 56
      %v1259 = vpop.permute.xlu0 %1258
      %1260 = vrot.lane.b32.xlu0 %v1255, 56
      %v1261 = vpop.permute.xlu0 %1260
      %1264 = vst.msk [vmem:[#allocation5 + $0x38] sm:$0xf] %vm946, %v1259
      %1265 = vst.msk [vmem:[#allocation5 + $0x3c] sm:$0xf] %vm946, %v1261
      %v1266 = vld [vmem:[%s1137 + $0x4] sm:$0xf]
      %v1267 = vld [vmem:[%s1137 + $0xc] sm:$0xf]
      %v1268 = vmul.bf16 %v1266, %v1120
      %v1269 = vmul.bf16 %v1267, %v1120
      %1272 = vrot.lane.b32.xlu0 %v1268, 55
      %v1273 = vpop.permute.xlu0 %1272
      %1274 = vrot.lane.b32.xlu0 %v1269, 55
      %v1275 = vpop.permute.xlu0 %1274
      %1278 = vst.msk [vmem:[#allocation5 + $0x40] sm:$0xf] %vm946, %v1273
      %1279 = vst.msk [vmem:[#allocation5 + $0x44] sm:$0xf] %vm946, %v1275
      %v1280 = vld [vmem:[%s2] sm:$0xff]
      %v1281 = vld [vmem:[#allocation4] sm:$0xff]
      %v1282 = vld [vmem:[#allocation4 + $0x8] sm:$0xff]
      %v1283 = vld [vmem:[#allocation4 + $0x10] sm:$0xff]
      %v1284 = vld [vmem:[#allocation4 + $0x18] sm:$0xff]
      %v1285 = vld [vmem:[#allocation4 + $0x20] sm:$0xff]
      %v1286 = vld [vmem:[#allocation4 + $0x28] sm:$0xff]
      %v1287 = vld [vmem:[#allocation4 + $0x30] sm:$0xff]
      %v1288 = vld [vmem:[#allocation4 + $0x38] sm:$0xff]
      %v1289 = vld [vmem:[#allocation4 + $0x40] sm:$0xff]
      %v1290 = vld [vmem:[#allocation4 + $0x48] sm:$0xff]
      %v1291 = vld [vmem:[#allocation4 + $0x50] sm:$0xff]
      %v1292 = vld [vmem:[#allocation4 + $0x58] sm:$0xff]
      %v1293 = vld [vmem:[#allocation4 + $0x60] sm:$0xff]
      %v1294 = vld [vmem:[#allocation4 + $0x68] sm:$0xff]
      %v1295 = vld [vmem:[#allocation4 + $0x70] sm:$0xff]
      %v1296 = vld [vmem:[#allocation4 + $0x78] sm:$0xff]
      %v1297 = vld [vmem:[#allocation4 + $0x80] sm:$0xff]
      %v1298 = vld [vmem:[#allocation4 + $0x88] sm:$0xff]
      %v1299 = vld [vmem:[#allocation4 + $0x90] sm:$0xff]
      %v1300 = vld [vmem:[#allocation4 + $0x98] sm:$0xff]
      %v1301 = vld [vmem:[#allocation4 + $0xa0] sm:$0xff]
      %v1302 = vld [vmem:[#allocation4 + $0xa8] sm:$0xff]
      %v1303 = vld [vmem:[#allocation4 + $0xb0] sm:$0xff]
      %v1304 = vld [vmem:[#allocation4 + $0xb8] sm:$0xff]
      %v1305 = vld [vmem:[#allocation4 + $0xc0] sm:$0xff]
      %v1306 = vld [vmem:[#allocation4 + $0xc8] sm:$0xff]
      %v1307 = vld [vmem:[#allocation4 + $0xd0] sm:$0xff]
      %v1308 = vld [vmem:[#allocation4 + $0xd8] sm:$0xff]
      %v1309 = vld [vmem:[#allocation4 + $0xe0] sm:$0xff]
      %v1310 = vld [vmem:[#allocation4 + $0xe8] sm:$0xff]
      %v1311 = vld [vmem:[#allocation4 + $0xf0] sm:$0xff]
      %v1312 = vld [vmem:[#allocation4 + $0xf8] sm:$0xff]
      %v1313 = vld [vmem:[#allocation4 + $0x100] sm:$0xff]
      %v1314 = vld [vmem:[#allocation4 + $0x108] sm:$0xff]
      %v1315 = vld [vmem:[#allocation4 + $0x110] sm:$0xff]
      %v1316 = vld [vmem:[#allocation4 + $0x118] sm:$0xff]
      %v1318 = vunpack.c.l.b16 %v1280
      %v1319 = vunpack.c.h.b16 %v1280
      %v1320 = vpack.c.b16 %v1318, %v1318
      %v1321 = vpack.c.b16 %v1319, %v1319
      %v1359 = vunpack.c.l.b16 %v1281
      %v1360 = vunpack.c.h.b16 %v1281
      %v1361 = vunpack.c.l.b16 %v1282
      %v1362 = vunpack.c.h.b16 %v1282
      %v1363 = vunpack.c.l.b16 %v1283
      %v1364 = vunpack.c.h.b16 %v1283
      %v1365 = vunpack.c.l.b16 %v1284
      %v1366 = vunpack.c.h.b16 %v1284
      %v1367 = vunpack.c.l.b16 %v1285
      %v1368 = vunpack.c.h.b16 %v1285
      %v1369 = vunpack.c.l.b16 %v1286
      %v1370 = vunpack.c.h.b16 %v1286
      %v1371 = vunpack.c.l.b16 %v1287
      %v1372 = vunpack.c.h.b16 %v1287
      %v1373 = vunpack.c.l.b16 %v1288
      %v1374 = vunpack.c.h.b16 %v1288
      %v1375 = vunpack.c.l.b16 %v1289
      %v1376 = vunpack.c.h.b16 %v1289
      %v1377 = vunpack.c.l.b16 %v1290
      %v1378 = vunpack.c.h.b16 %v1290
      %v1379 = vunpack.c.l.b16 %v1291
      %v1380 = vunpack.c.h.b16 %v1291
      %v1381 = vunpack.c.l.b16 %v1292
      %v1382 = vunpack.c.h.b16 %v1292
      %v1383 = vunpack.c.l.b16 %v1293
      %v1384 = vunpack.c.h.b16 %v1293
      %v1385 = vunpack.c.l.b16 %v1294
      %v1386 = vunpack.c.h.b16 %v1294
      %v1387 = vunpack.c.l.b16 %v1295
      %v1388 = vunpack.c.h.b16 %v1295
      %v1389 = vunpack.c.l.b16 %v1296
      %v1390 = vunpack.c.h.b16 %v1296
      %v1391 = vunpack.c.l.b16 %v1297
      %v1392 = vunpack.c.h.b16 %v1297
      %v1393 = vunpack.c.l.b16 %v1298
      %v1394 = vunpack.c.h.b16 %v1298
      %v1395 = vunpack.c.l.b16 %v1299
      %v1396 = vunpack.c.h.b16 %v1299
      %v1397 = vunpack.c.l.b16 %v1300
      %v1398 = vunpack.c.h.b16 %v1300
      %v1399 = vunpack.c.l.b16 %v1301
      %v1400 = vunpack.c.h.b16 %v1301
      %v1401 = vunpack.c.l.b16 %v1302
      %v1402 = vunpack.c.h.b16 %v1302
      %v1403 = vunpack.c.l.b16 %v1303
      %v1404 = vunpack.c.h.b16 %v1303
      %v1405 = vunpack.c.l.b16 %v1304
      %v1406 = vunpack.c.h.b16 %v1304
      %v1407 = vunpack.c.l.b16 %v1305
      %v1408 = vunpack.c.h.b16 %v1305
      %v1409 = vunpack.c.l.b16 %v1306
      %v1410 = vunpack.c.h.b16 %v1306
      %v1411 = vunpack.c.l.b16 %v1307
      %v1412 = vunpack.c.h.b16 %v1307
      %v1413 = vunpack.c.l.b16 %v1308
      %v1414 = vunpack.c.h.b16 %v1308
      %v1415 = vunpack.c.l.b16 %v1309
      %v1416 = vunpack.c.h.b16 %v1309
      %v1417 = vunpack.c.l.b16 %v1310
      %v1418 = vunpack.c.h.b16 %v1310
      %v1419 = vunpack.c.l.b16 %v1311
      %v1420 = vunpack.c.h.b16 %v1311
      %v1421 = vunpack.c.l.b16 %v1312
      %v1422 = vunpack.c.h.b16 %v1312
      %v1423 = vunpack.c.l.b16 %v1313
      %v1424 = vunpack.c.h.b16 %v1313
      %v1425 = vunpack.c.l.b16 %v1314
      %v1426 = vunpack.c.h.b16 %v1314
      %v1427 = vunpack.c.l.b16 %v1315
      %v1428 = vunpack.c.h.b16 %v1315
      %v1429 = vunpack.c.l.b16 %v1316
      %v1430 = vunpack.c.h.b16 %v1316
      %v1431 = vpack.c.b16 %v1363, %v1359
      %v1432 = vpack.c.b16 %v1364, %v1360
      %v1433 = vpack.c.b16 %v1365, %v1361
      %v1434 = vpack.c.b16 %v1366, %v1362
      %v1435 = vpack.c.b16 %v1371, %v1367
      %v1436 = vpack.c.b16 %v1372, %v1368
      %v1437 = vpack.c.b16 %v1373, %v1369
      %v1438 = vpack.c.b16 %v1374, %v1370
      %v1439 = vpack.c.b16 %v1379, %v1375
      %v1440 = vpack.c.b16 %v1380, %v1376
      %v1441 = vpack.c.b16 %v1381, %v1377
      %v1442 = vpack.c.b16 %v1382, %v1378
      %v1443 = vpack.c.b16 %v1387, %v1383
      %v1444 = vpack.c.b16 %v1388, %v1384
      %v1445 = vpack.c.b16 %v1389, %v1385
      %v1446 = vpack.c.b16 %v1390, %v1386
      %v1447 = vpack.c.b16 %v1395, %v1391
      %v1448 = vpack.c.b16 %v1396, %v1392
      %v1449 = vpack.c.b16 %v1397, %v1393
      %v1450 = vpack.c.b16 %v1398, %v1394
      %v1451 = vpack.c.b16 %v1403, %v1399
      %v1452 = vpack.c.b16 %v1404, %v1400
      %v1453 = vpack.c.b16 %v1405, %v1401
      %v1454 = vpack.c.b16 %v1406, %v1402
      %v1455 = vpack.c.b16 %v1411, %v1407
      %v1456 = vpack.c.b16 %v1412, %v1408
      %v1457 = vpack.c.b16 %v1413, %v1409
      %v1458 = vpack.c.b16 %v1414, %v1410
      %v1459 = vpack.c.b16 %v1419, %v1415
      %v1460 = vpack.c.b16 %v1420, %v1416
      %v1461 = vpack.c.b16 %v1421, %v1417
      %v1462 = vpack.c.b16 %v1422, %v1418
      %v1463 = vpack.c.b16 %v1427, %v1423
      %v1464 = vpack.c.b16 %v1428, %v1424
      %v1465 = vpack.c.b16 %v1429, %v1425
      %v1466 = vpack.c.b16 %v1430, %v1426
      %vm1503 = vcmask 130048
      %v1505 = vsel %vm1503, %v1321, 0
      %1507 = vmatprep.subr.bf16.mxu0 %v1460
      %1508 = vmatpush1.bf16.msra.mxu0 %v1459
      %1509 = vmatprep.subr.bf16.mxu0 %v1456
      %1510 = vmatpush1.bf16.msra.mxu0 %v1455
      %1511 = vmatprep.subr.bf16.mxu0 %v1452
      %1512 = vmatpush1.bf16.msra.mxu0 %v1451
      %1513 = vmatprep.subr.bf16.mxu0 %v1448
      %1514 = vmatpush1.bf16.msra.mxu0 %v1447
      %1515 = vmatprep.subr.bf16.mxu0 %v1444
      %1516 = vmatpush1.bf16.msra.mxu0 %v1443
      %1517 = vmatprep.subr.bf16.mxu0 %v1440
      %1518 = vmatpush1.bf16.msra.mxu0 %v1439
      %1519 = vmatprep.subr.bf16.mxu0 %v1436
      %1520 = vmatpush1.bf16.msra.mxu0 %v1435
      %1521 = vmatprep.subr.bf16.mxu0 %v1432
      %1522 = vmatpush1.bf16.msra.mxu0 %v1431
      %1523 = vmatprep.subr.bf16.mxu0 0
      %1524 = vmatpush2.bf16.msra.mxu0 0
      %1525 = vmatprep.subr.bf16.mxu0 0
      %1526 = vmatpush2.bf16.msra.mxu0 0
      %1527 = vmatprep.subr.bf16.mxu0 0
      %1528 = vmatpush2.bf16.msra.mxu0 0
      %1529 = vmatprep.subr.bf16.mxu0 0
      %1530 = vmatpush2.bf16.msra.mxu0 0
      %1531 = vmatprep.subr.bf16.mxu0 0
      %1532 = vmatpush2.bf16.msra.mxu0 0
      %1533 = vmatprep.subr.bf16.mxu0 0
      %1534 = vmatpush2.bf16.msra.mxu0 0
      %1535 = vmatprep.subr.bf16.mxu0 0
      %1536 = vmatpush2.bf16.msra.mxu0 0
      %1537 = vmatprep.subr.bf16.mxu0 %v1464
      %1538 = vmatpush2.bf16.msra.mxu0 %v1463
      %1539 = vmatprep.mubr.bf16.mxu0 %v1505
      %1540 = vmatmul.mubr.bf16.gmra.mxu0 %v1320
      %v1541 = vpop.f32.mrf.mxu0
      %v1542 = vadd.f32 0.0, %v1541
      %v1543 = vpop.f32.mrf.mxu0
      %v1544 = vadd.f32 0.0, %v1543
      %v1545 = vpop.f32.mrf.mxu0
      %v1546 = vpop.f32.mrf.mxu0
      %1547 = vdwg.mxu0
      %1548 = vmatprep.subr.bf16.mxu0 %v1462
      %1549 = vmatpush1.bf16.msra.mxu0 %v1461
      %1550 = vmatprep.subr.bf16.mxu0 %v1458
      %1551 = vmatpush1.bf16.msra.mxu0 %v1457
      %1552 = vmatprep.subr.bf16.mxu0 %v1454
      %1553 = vmatpush1.bf16.msra.mxu0 %v1453
      %1554 = vmatprep.subr.bf16.mxu0 %v1450
      %1555 = vmatpush1.bf16.msra.mxu0 %v1449
      %1556 = vmatprep.subr.bf16.mxu0 %v1446
      %1557 = vmatpush1.bf16.msra.mxu0 %v1445
      %1558 = vmatprep.subr.bf16.mxu0 %v1442
      %1559 = vmatpush1.bf16.msra.mxu0 %v1441
      %1560 = vmatprep.subr.bf16.mxu0 %v1438
      %1561 = vmatpush1.bf16.msra.mxu0 %v1437
      %1562 = vmatprep.subr.bf16.mxu0 %v1434
      %1563 = vmatpush1.bf16.msra.mxu0 %v1433
      %1564 = vmatprep.subr.bf16.mxu0 0
      %1565 = vmatpush2.bf16.msra.mxu0 0
      %1566 = vmatprep.subr.bf16.mxu0 0
      %1567 = vmatpush2.bf16.msra.mxu0 0
      %1568 = vmatprep.subr.bf16.mxu0 0
      %1569 = vmatpush2.bf16.msra.mxu0 0
      %1570 = vmatprep.subr.bf16.mxu0 0
      %1571 = vmatpush2.bf16.msra.mxu0 0
      %1572 = vmatprep.subr.bf16.mxu0 0
      %1573 = vmatpush2.bf16.msra.mxu0 0
      %1574 = vmatprep.subr.bf16.mxu0 0
      %1575 = vmatpush2.bf16.msra.mxu0 0
      %1576 = vmatprep.subr.bf16.mxu0 0
      %1577 = vmatpush2.bf16.msra.mxu0 0
      %1578 = vmatprep.subr.bf16.mxu0 %v1466
      %1579 = vmatpush2.bf16.msra.mxu0 %v1465
      %1580 = vmatprep.mubr.bf16.mxu0 %v1505
      %1581 = vmatmul.mubr.bf16.gmra.mxu0 %v1320
      %v1582 = vpop.f32.mrf.mxu0
      %v1583 = vadd.f32 0.0, %v1582
      %v1584 = vpop.f32.mrf.mxu0
      %v1585 = vadd.f32 0.0, %v1584
      %v1586 = vpop.f32.mrf.mxu0
      %v1587 = vpop.f32.mrf.mxu0
      %1588 = vdwg.mxu0
      %v1589 = vld [vmem:[%s3] sm:$0xff]
      %v1590 = vld [vmem:[#allocation5] sm:$0xf]
      %v1591 = vld [vmem:[#allocation5 + $0x4] sm:$0xf]
      %v1592 = vld [vmem:[#allocation5 + $0x8] sm:$0xf]
      %v1593 = vld [vmem:[#allocation5 + $0xc] sm:$0xf]
      %v1594 = vld [vmem:[#allocation5 + $0x10] sm:$0xf]
      %v1595 = vld [vmem:[#allocation5 + $0x14] sm:$0xf]
      %v1596 = vld [vmem:[#allocation5 + $0x18] sm:$0xf]
      %v1597 = vld [vmem:[#allocation5 + $0x1c] sm:$0xf]
      %v1598 = vld [vmem:[#allocation5 + $0x20] sm:$0xf]
      %v1599 = vld [vmem:[#allocation5 + $0x24] sm:$0xf]
      %v1600 = vld [vmem:[#allocation5 + $0x28] sm:$0xf]
      %v1601 = vld [vmem:[#allocation5 + $0x2c] sm:$0xf]
      %v1602 = vld [vmem:[#allocation5 + $0x30] sm:$0xf]
      %v1603 = vld [vmem:[#allocation5 + $0x34] sm:$0xf]
      %v1604 = vld [vmem:[#allocation5 + $0x38] sm:$0xf]
      %v1605 = vld [vmem:[#allocation5 + $0x3c] sm:$0xf]
      %v1606 = vld [vmem:[#allocation5 + $0x40] sm:$0xf]
      %v1607 = vld [vmem:[#allocation5 + $0x44] sm:$0xf]
      %v1609 = vunpack.c.l.b16 %v1589
      %v1610 = vunpack.c.h.b16 %v1589
      %v1611 = vpack.c.b16 %v1609, %v1609
      %v1612 = vpack.c.b16 %v1610, %v1610
      %v1632 = vunpack.c.l.b16 %v1590
      %v1633 = vunpack.c.l.b16 %v1591
      %v1634 = vunpack.c.l.b16 %v1592
      %v1635 = vunpack.c.l.b16 %v1593
      %v1636 = vunpack.c.l.b16 %v1594
      %v1637 = vunpack.c.l.b16 %v1595
      %v1638 = vunpack.c.l.b16 %v1596
      %v1639 = vunpack.c.l.b16 %v1597
      %v1640 = vunpack.c.l.b16 %v1598
      %v1641 = vunpack.c.l.b16 %v1599
      %v1642 = vunpack.c.l.b16 %v1600
      %v1643 = vunpack.c.l.b16 %v1601
      %v1644 = vunpack.c.l.b16 %v1602
      %v1645 = vunpack.c.l.b16 %v1603
      %v1646 = vunpack.c.l.b16 %v1604
      %v1647 = vunpack.c.l.b16 %v1605
      %v1648 = vunpack.c.l.b16 %v1606
      %v1649 = vunpack.c.l.b16 %v1607
      %v1650 = vpack.c.b16 %v1633, %v1632
      %v1651 = vpack.c.b16 %v1635, %v1634
      %v1652 = vpack.c.b16 %v1637, %v1636
      %v1653 = vpack.c.b16 %v1639, %v1638
      %v1654 = vpack.c.b16 %v1641, %v1640
      %v1655 = vpack.c.b16 %v1643, %v1642
      %v1656 = vpack.c.b16 %v1645, %v1644
      %v1657 = vpack.c.b16 %v1647, %v1646
      %v1658 = vpack.c.b16 %v1649, %v1648
      %v1669 = vsel %vm1503, %v1612, 0
      %1671 = vmatprep.subr.bf16.mxu0 0
      %1672 = vmatpush1.bf16.msra.mxu0 %v1657
      %1673 = vmatprep.subr.bf16.mxu0 0
      %1674 = vmatpush1.bf16.msra.mxu0 %v1656
      %1675 = vmatprep.subr.bf16.mxu0 0
      %1676 = vmatpush1.bf16.msra.mxu0 %v1655
      %1677 = vmatprep.subr.bf16.mxu0 0
      %1678 = vmatpush1.bf16.msra.mxu0 %v1654
      %1679 = vmatprep.subr.bf16.mxu0 0
      %1680 = vmatpush1.bf16.msra.mxu0 %v1653
      %1681 = vmatprep.subr.bf16.mxu0 0
      %1682 = vmatpush1.bf16.msra.mxu0 %v1652
      %1683 = vmatprep.subr.bf16.mxu0 0
      %1684 = vmatpush1.bf16.msra.mxu0 %v1651
      %1685 = vmatprep.subr.bf16.mxu0 0
      %1686 = vmatpush1.bf16.msra.mxu0 %v1650
      %1687 = vmatprep.subr.bf16.mxu0 0
      %1688 = vmatpush2.bf16.msra.mxu0 0
      %1689 = vmatprep.subr.bf16.mxu0 0
      %1690 = vmatpush2.bf16.msra.mxu0 0
      %1691 = vmatprep.subr.bf16.mxu0 0
      %1692 = vmatpush2.bf16.msra.mxu0 0
      %1693 = vmatprep.subr.bf16.mxu0 0
      %1694 = vmatpush2.bf16.msra.mxu0 0
      %1695 = vmatprep.subr.bf16.mxu0 0
      %1696 = vmatpush2.bf16.msra.mxu0 0
      %1697 = vmatprep.subr.bf16.mxu0 0
      %1698 = vmatpush2.bf16.msra.mxu0 0
      %1699 = vmatprep.subr.bf16.mxu0 0
      %1700 = vmatpush2.bf16.msra.mxu0 0
      %1701 = vmatprep.subr.bf16.mxu0 0
      %1702 = vmatpush2.bf16.msra.mxu0 %v1658
      %1703 = vmatprep.mubr.bf16.mxu0 %v1669
      %1704 = vmatmul.mubr.bf16.gmra.mxu0 %v1611
      %v1705 = vpop.f32.mrf.mxu0
      %v1706 = vadd.f32 0.0, %v1705
      %v1707 = vpop.f32.mrf.mxu0
      %v1708 = vpop.f32.mrf.mxu0
      %v1709 = vpop.f32.mrf.mxu0
      %1710 = vdwg.mxu0
      %v1711 = vld [vmem:[%s6] sm:$0xff]
      %v1712 = vld [vmem:[%s6 + $0x8] sm:$0xff]
      %v1713 = vld [vmem:[%s6 + $0x10] sm:$0xff]
      %v1714 = vld [vmem:[%s6 + $0x18] sm:$0xff]
      %v1715 = vld [vmem:[%s6 + $0x20] sm:$0xff]
      %v1716 = vld [vmem:[%s6 + $0x28] sm:$0xff]
      %v1717 = vld [vmem:[%s6 + $0x30] sm:$0xff]
      %v1718 = vld [vmem:[%s6 + $0x38] sm:$0xff]
      %v1719 = vld [vmem:[%s6 + $0x40] sm:$0xff]
      %v1720 = vld [vmem:[%s6 + $0x48] sm:$0xff]
      %v1721 = vld [vmem:[%s6 + $0x50] sm:$0xff]
      %v1722 = vld [vmem:[%s6 + $0x58] sm:$0xff]
      %v1723 = vld [vmem:[%s6 + $0x60] sm:$0xff]
      %v1724 = vld [vmem:[%s6 + $0x68] sm:$0xff]
      %v1725 = vld [vmem:[%s6 + $0x70] sm:$0xff]
      %v1726 = vld [vmem:[%s6 + $0x78] sm:$0xff]
      %vm1727 = vcmask 523264
      %v1729 = vsel %vm1727, %v1706, 0
      %1731 = vmatprep.subr.mxu0 0.0
      %1732 = vmatpush1.msra.mxu0 0.0
      %1733 = vmatprep.subr.mxu0 0.0
      %1734 = vmatpush1.msra.mxu0 0.0
      %1735 = vmatprep.subr.mxu0 0.0
      %1736 = vmatpush1.msra.mxu0 0.0
      %1737 = vmatprep.subr.mxu0 0.0
      %1738 = vmatpush1.msra.mxu0 0.0
      %1739 = vmatprep.subr.mxu0 0.0
      %1740 = vmatpush1.msra.mxu0 0.0
      %1741 = vmatprep.subr.mxu0 0.0
      %1742 = vmatpush1.msra.mxu0 0.0
      %1743 = vmatprep.subr.mxu0 0.0
      %1744 = vmatpush1.msra.mxu0 0.0
      %1745 = vmatprep.subr.mxu0 0.0
      %1746 = vmatpush1.msra.mxu0 0.0
      %1747 = vmatprep.subr.mxu0 %v1726
      %1748 = vmatpush1.msra.mxu0 %v1725
      %1749 = vmatprep.subr.mxu0 %v1724
      %1750 = vmatpush1.msra.mxu0 %v1723
      %1751 = vmatprep.subr.mxu0 %v1722
      %1752 = vmatpush1.msra.mxu0 %v1721
      %1753 = vmatprep.subr.mxu0 %v1720
      %1754 = vmatpush1.msra.mxu0 %v1719
      %1755 = vmatprep.subr.mxu0 %v1718
      %1756 = vmatpush1.msra.mxu0 %v1717
      %1757 = vmatprep.subr.mxu0 %v1716
      %1758 = vmatpush1.msra.mxu0 %v1715
      %1759 = vmatprep.subr.mxu0 %v1714
      %1760 = vmatpush1.msra.mxu0 %v1713
      %1761 = vmatprep.subr.mxu0 %v1712
      %1762 = vmatpush1.msra.mxu0 %v1711
      %1763 = vmatprep.subr.mxu0 0.0
      %1764 = vmatpush2.msra.mxu0 0.0
      %1765 = vmatprep.subr.mxu0 0.0
      %1766 = vmatpush2.msra.mxu0 0.0
      %1767 = vmatprep.subr.mxu0 0.0
      %1768 = vmatpush2.msra.mxu0 0.0
      %1769 = vmatprep.subr.mxu0 0.0
      %1770 = vmatpush2.msra.mxu0 0.0
      %1771 = vmatprep.subr.mxu0 0.0
      %1772 = vmatpush2.msra.mxu0 0.0
      %1773 = vmatprep.subr.mxu0 0.0
      %1774 = vmatpush2.msra.mxu0 0.0
      %1775 = vmatprep.subr.mxu0 0.0
      %1776 = vmatpush2.msra.mxu0 0.0
      %1777 = vmatprep.subr.mxu0 0.0
      %1778 = vmatpush2.msra.mxu0 0.0
      %1779 = vmatprep.subr.mxu0 0.0
      %1780 = vmatpush2.msra.mxu0 0.0
      %1781 = vmatprep.subr.mxu0 0.0
      %1782 = vmatpush2.msra.mxu0 0.0
      %1783 = vmatprep.subr.mxu0 0.0
      %1784 = vmatpush2.msra.mxu0 0.0
      %1785 = vmatprep.subr.mxu0 0.0
      %1786 = vmatpush2.msra.mxu0 0.0
      %1787 = vmatprep.subr.mxu0 0.0
      %1788 = vmatpush2.msra.mxu0 0.0
      %1789 = vmatprep.subr.mxu0 0.0
      %1790 = vmatpush2.msra.mxu0 0.0
      %1791 = vmatprep.subr.mxu0 0.0
      %1792 = vmatpush2.msra.mxu0 0.0
      %1793 = vmatprep.subr.mxu0 0.0
      %1794 = vmatpush2.msra.mxu0 0.0
      %1795 = vmatprep.mubr.f32.mxu0 0.0
      %1796 = vmatmul.mubr.f32.gmra.mxu0 %v1729
      %v1797 = vpop.f32.mrf.mxu0
      %v1798 = vadd.f32 0.0, %v1797
      %v1799 = vpop.f32.mrf.mxu0
      %v1800 = vadd.f32 0.0, %v1799
      %1801 = vdwg.mxu0
      %v1802 = vadd.f32 %v1542, %v1798
      %v1803 = vadd.f32 %v1544, %v1800
      %1804 = vst [vmem:[%s310] sm:$0xff] %v1802
      %1805 = vst [vmem:[%s310 + $0x8] sm:$0xff] %v1803
      %1806 = vrot.lane.b32.xlu0 %v1706, 64
      %v1807 = vpop.permute.xlu0 %1806
      %v1808 = vsel %vm1727, %v1807, 0
      %1810 = vmatprep.subr.mxu0 0.0
      %1811 = vmatpush1.msra.mxu0 0.0
      %1812 = vmatprep.subr.mxu0 0.0
      %1813 = vmatpush1.msra.mxu0 0.0
      %1814 = vmatprep.subr.mxu0 0.0
      %1815 = vmatpush1.msra.mxu0 0.0
      %1816 = vmatprep.subr.mxu0 0.0
      %1817 = vmatpush1.msra.mxu0 0.0
      %1818 = vmatprep.subr.mxu0 0.0
      %1819 = vmatpush1.msra.mxu0 0.0
      %1820 = vmatprep.subr.mxu0 0.0
      %1821 = vmatpush1.msra.mxu0 0.0
      %1822 = vmatprep.subr.mxu0 0.0
      %1823 = vmatpush1.msra.mxu0 0.0
      %1824 = vmatprep.subr.mxu0 0.0
      %1825 = vmatpush1.msra.mxu0 0.0
      %1826 = vmatprep.subr.mxu0 %v1726
      %1827 = vmatpush1.msra.mxu0 %v1725
      %1828 = vmatprep.subr.mxu0 %v1724
      %1829 = vmatpush1.msra.mxu0 %v1723
      %1830 = vmatprep.subr.mxu0 %v1722
      %1831 = vmatpush1.msra.mxu0 %v1721
      %1832 = vmatprep.subr.mxu0 %v1720
      %1833 = vmatpush1.msra.mxu0 %v1719
      %1834 = vmatprep.subr.mxu0 %v1718
      %1835 = vmatpush1.msra.mxu0 %v1717
      %1836 = vmatprep.subr.mxu0 %v1716
      %1837 = vmatpush1.msra.mxu0 %v1715
      %1838 = vmatprep.subr.mxu0 %v1714
      %1839 = vmatpush1.msra.mxu0 %v1713
      %1840 = vmatprep.subr.mxu0 %v1712
      %1841 = vmatpush1.msra.mxu0 %v1711
      %1842 = vmatprep.subr.mxu0 0.0
      %1843 = vmatpush2.msra.mxu0 0.0
      %1844 = vmatprep.subr.mxu0 0.0
      %1845 = vmatpush2.msra.mxu0 0.0
      %1846 = vmatprep.subr.mxu0 0.0
      %1847 = vmatpush2.msra.mxu0 0.0
      %1848 = vmatprep.subr.mxu0 0.0
      %1849 = vmatpush2.msra.mxu0 0.0
      %1850 = vmatprep.subr.mxu0 0.0
      %1851 = vmatpush2.msra.mxu0 0.0
      %1852 = vmatprep.subr.mxu0 0.0
      %1853 = vmatpush2.msra.mxu0 0.0
      %1854 = vmatprep.subr.mxu0 0.0
      %1855 = vmatpush2.msra.mxu0 0.0
      %1856 = vmatprep.subr.mxu0 0.0
      %1857 = vmatpush2.msra.mxu0 0.0
      %1858 = vmatprep.subr.mxu0 0.0
      %1859 = vmatpush2.msra.mxu0 0.0
      %1860 = vmatprep.subr.mxu0 0.0
      %1861 = vmatpush2.msra.mxu0 0.0
      %1862 = vmatprep.subr.mxu0 0.0
      %1863 = vmatpush2.msra.mxu0 0.0
      %1864 = vmatprep.subr.mxu0 0.0
      %1865 = vmatpush2.msra.mxu0 0.0
      %1866 = vmatprep.subr.mxu0 0.0
      %1867 = vmatpush2.msra.mxu0 0.0
      %1868 = vmatprep.subr.mxu0 0.0
      %1869 = vmatpush2.msra.mxu0 0.0
      %1870 = vmatprep.subr.mxu0 0.0
      %1871 = vmatpush2.msra.mxu0 0.0
      %1872 = vmatprep.subr.mxu0 0.0
      %1873 = vmatpush2.msra.mxu0 0.0
      %1874 = vmatprep.mubr.f32.mxu0 0.0
      %1875 = vmatmul.mubr.f32.gmra.mxu0 %v1808
      %v1876 = vpop.f32.mrf.mxu0
      %v1877 = vadd.f32 0.0, %v1876
      %v1878 = vpop.f32.mrf.mxu0
      %v1879 = vadd.f32 0.0, %v1878
      %1880 = vdwg.mxu0
      %v1881 = vadd.f32 %v1583, %v1877
      %v1882 = vadd.f32 %v1585, %v1879
      %s1883 = scalar_lea.vmem %s310, 16
      %1884 = vst [vmem:[%s1883] sm:$0xff] %v1881
      %1885 = vst [vmem:[%s1883 + $0x8] sm:$0xff] %v1882
      %s1886 = smul.u32 2, %s18
      %p1887 = scmp.lt.s32.totalorder %s1886, 3
      %s1888 = scalar_select %p1887, %s1886, 3
      %s1889 = smul.addr %s1888, 2
      %s1890 = smul.addr %s1889, 8
      %s1891 = scalar_lea.vmem %s7, %s1890
      // Predicated region
      $region49: #{last_octave_conv_pallas.1} parent=47 // pred_check
        %p1892 = pneg %p193
      $region50: #{last_octave_conv_pallas.1} parent=47 // pred_check_branch
        %1894 = sbr.rel (%p1892) target = $region52
      $region51: #{last_octave_conv_pallas.1} parent=47 // pred_region
        %s1895 = smul.u32 2, %s18
      $region52: #{last_octave_conv_pallas.1} parent=47 // pred_fallthru
        _
    $region48: #{last_octave_conv_pallas.1} parent=5 // pred_fallthru
      _
    %p1896 = scmp.le.s32.totalorder 2, %s13
    // Predicated region
    $region53: #{last_octave_conv_pallas.1} parent=5 // pred_check
      %p1897 = pneg %p1896
    $region54: #{last_octave_conv_pallas.1} parent=5 // pred_check_branch
      %1899 = sbr.rel (%p1897) target = $region56
    $region55: #{last_octave_conv_pallas.1} parent=5 // pred_region
      %s1900 = ssub.s32 %s13, 2
      // Predicated region
      $region57: #{last_octave_conv_pallas.1} parent=55 // pred_check
        %p1901 = pneg %p199
      $region58: #{last_octave_conv_pallas.1} parent=55 // pred_check_branch
        %1903 = sbr.rel (%p1901) target = $region60
      $region59: #{last_octave_conv_pallas.1} parent=55 // pred_region
        %s1904 = smul.u32 2, %s19
        %p1905 = scmp.lt.s32.totalorder %s1904, 3
        %s1906 = scalar_select %p1905, %s1904, 3
        %s1907 = smul.addr %s1906, 2
        %s1908 = smul.addr %s1907, 8
        %s1909 = scalar_lea.vmem %s7, %s1908
      $region60: #{last_octave_conv_pallas.1} parent=55 // pred_fallthru
        _
    $region56: #{last_octave_conv_pallas.1} parent=5 // pred_fallthru
      _
  $region6: #{last_octave_conv_pallas.1} parent=0 // loop_footer
    %s17 = sadd.s32 1, %s13
  $region7: #{last_octave_conv_pallas.1} parent=0 // loop_footer_branch
    %12 = sbr.rel target = $region3
  $region8: #{last_octave_conv_pallas.1} parent=0 // loop_exit
    _

</llo_original>
